<compile_context>
chip_gen: v7x
topology: tpu7x:2x2x1
jax: 0.10.0
libtpu: 0.0.40
codegen_flags: <defaults>
</compile_context>

<pallas_src>
import functools

import jax
import jax.numpy as jnp
from jax import lax
from jax.experimental import pallas as pl
from jax.experimental.pallas import tpu as pltpu

_NEG = -1e30  # "minus infinity" that survives (-1e30) - (-1e30) arithmetic in f32


def _clip_loss_kernel(scale_ref, img_ref, txt_ref, out_ref,
                      m_r, l_r, m_c, l_c, rsum, csum, trace,
                      *txt_vmem_maybe, b, needs_mask):
    text_resident = len(txt_vmem_maybe) == 1
    i = pl.program_id(0)
    j = pl.program_id(1)
    n_i = pl.num_programs(0)
    n_j = pl.num_programs(1)
    t = img_ref.shape[0]

    # ---- one-time init (first grid step) ------------------------------------
    @pl.when((i == 0) & (j == 0))
    def _():
        if text_resident:
            # Copy the whole text matrix HBM -> VMEM exactly once; it stays
            # resident in the scratch for every subsequent grid step.
            pltpu.sync_copy(txt_ref, txt_vmem_maybe[0])
        rsum[...] = jnp.zeros_like(rsum)
        csum[...] = jnp.zeros_like(csum)
        trace[...] = jnp.zeros_like(trace)

    if text_resident:
        col = pl.multiple_of(j * t, 128)
        txt = txt_vmem_maybe[0][pl.ds(col, t), :]      # [T, Dp] slice of resident text
    else:
        txt = txt_ref[...]                             # [T, Dp] streamed tile

    img = img_ref[...]                                 # [T, Dp] (reused across inner j)

    # One [T, T] logits block; MXU accumulates in f32, logit_scale applied to
    # the small f32 block (exact f32 scale even for bf16 inputs).
    s = lax.dot_general(img, txt, (((1,), (1,)), ((), ())),
                        preferred_element_type=jnp.float32)
    s = s * scale_ref[0, 0]

    # ---- per-axis accumulator init -------------------------------------------
    @pl.when(j == 0)
    def _():
        m_r[...] = jnp.full_like(m_r, _NEG)
        l_r[...] = jnp.zeros_like(l_r)

    @pl.when(i == 0)
    def _():
        m_c[j] = jnp.full((1, t), _NEG, jnp.float32)
        l_c[j] = jnp.zeros((1, t), jnp.float32)

    # ---- trace: target logits live on the diagonal of diagonal blocks --------
    # Padded rows are zero-padded in both inputs, so their diagonal logit is
    # exactly 0 and needs no mask.  Uses the pre-bias block (consistent with MXU).
    @pl.when(i == j)
    def _():
        rr = lax.broadcasted_iota(jnp.int32, (t, t), 0)
        cc = lax.broadcasted_iota(jnp.int32, (t, t), 1)
        trace[...] += jnp.sum(jnp.where(rr == cc, s, 0.0), keepdims=True)

    # ---- padding mask as two additive broadcast biases ------------------------
    if needs_mask:
        row_ids = i * t + lax.broadcasted_iota(jnp.int32, (t, 1), 0)
        col_ids = j * t + lax.broadcasted_iota(jnp.int32, (1, t), 1)
        row_valid = row_ids < b                        # [T, 1]
        col_valid = col_ids < b                        # [1, T]
        s = s + jnp.where(row_valid, 0.0, _NEG) + jnp.where(col_valid, 0.0, _NEG)

    # ---- online row logsumexp (reduced across the inner j axis) ---------------
    m_prev = m_r[...]
    m_new = jnp.maximum(m_prev, jnp.max(s, axis=1, keepdims=True))
    l_new = (jnp.exp(m_prev - m_new) * l_r[...]
             + jnp.sum(jnp.exp(s - m_new), axis=1, keepdims=True))
    m_r[...] = m_new
    l_r[...] = l_new

    # ---- online column logsumexp (reduced across the outer i axis) ------------
    mc_prev = m_c[j]
    mc_new = jnp.maximum(mc_prev, jnp.max(s, axis=0, keepdims=True))
    lc_new = (jnp.exp(mc_prev - mc_new) * l_c[j]
              + jnp.sum(jnp.exp(s - mc_new), axis=0, keepdims=True))
    m_c[j] = mc_new
    l_c[j] = lc_new

    # ---- finalize this row tile at the last column tile ------------------------
    @pl.when(j == n_j - 1)
    def _():
        lse_r = m_new + jnp.log(l_new)                 # [T, 1]
        if needs_mask:
            lse_r = jnp.where(row_valid, lse_r, 0.0)
        rsum[...] += jnp.sum(lse_r, keepdims=True)

    # ---- finalize this column tile at the last row tile ------------------------
    @pl.when(i == n_i - 1)
    def _():
        lse_c = mc_new + jnp.log(lc_new)               # [1, T]
        if needs_mask:
            lse_c = jnp.where(col_valid, lse_c, 0.0)
        csum[...] += jnp.sum(lse_c, keepdims=True)

    # ---- final scalar loss ------------------------------------------------------
    @pl.when((i == n_i - 1) & (j == n_j - 1))
    def _():
        total = (rsum[...] + csum[...] - 2.0 * trace[...]) * (0.5 / b)
        out_ref[0, 0] = total[0, 0]


def _round_up(x, m):
    return (x + m - 1) // m * m


def clip_loss(image_features, text_features, logit_scale, *,
              block_b=512, compute_dtype=None,
              text_vmem_budget_bytes=24 << 20):
    """Single-device CLIP contrastive loss (CLIPLoss.forward, world_size == 1).

    compute_dtype: optionally cast inputs (e.g. jnp.bfloat16 on v5e) before the
    MXU; accumulation stays f32.  text_vmem_budget_bytes: max size of the
    VMEM-resident text panel (default 24 MiB, safe for v7x's 64 MiB VMEM); if
    exceeded, text falls back to per-tile streaming.
    """
    B, D = image_features.shape
    if compute_dtype is not None:
        image_features = image_features.astype(compute_dtype)
        text_features = text_features.astype(compute_dtype)

    # Lane-dense feature dim (zero-padding D is a no-op for every dot product)
    # and a square batch tile, multiple of 128, capped at block_b.
    Dp = _round_up(D, 128)
    T = min(_round_up(block_b, 128), _round_up(B, 128))
    Bp = _round_up(B, T)
    if (Bp, Dp) != (B, D):
        pad = ((0, Bp - B), (0, Dp - D))
        image_features = jnp.pad(image_features, pad)
        text_features = jnp.pad(text_features, pad)
    n = Bp // T
    needs_mask = Bp != B

    itemsize = jnp.dtype(image_features.dtype).itemsize
    text_bytes = Bp * Dp * itemsize
    text_resident = text_bytes <= text_vmem_budget_bytes

    if text_resident:
        text_spec = pl.BlockSpec(memory_space=pl.ANY)          # raw HBM ref, copied once
        extra_scratch = [pltpu.VMEM((Bp, Dp), image_features.dtype)]
        txt_bufs = text_bytes
    else:
        # Fallback: stream a [T, Dp] text tile per grid step (double-buffered).
        text_spec = pl.BlockSpec((T, Dp), lambda i, j: (j, 0))
        extra_scratch = []
        txt_bufs = 2 * T * Dp * itemsize

    # Explicit VMEM budget: double-buffered image tiles + text + [T,T] f32
    # temporaries + accumulator scratch, with headroom.
    img_bufs = 2 * T * Dp * itemsize
    tile_tmp = 6 * T * T * 4
    stats = (2 * T * 128 + 2 * n * 8 * T + 3 * 8 * 128) * 4
    vmem_limit = int(min(max(32 << 20, img_bufs + txt_bufs + tile_tmp + stats + (8 << 20)),
                         100 << 20))

    scale = jnp.asarray(logit_scale, jnp.float32).reshape(1, 1)
    kernel = functools.partial(_clip_loss_kernel, b=B, needs_mask=needs_mask)

    out = pl.pallas_call(
        kernel,
        grid=(n, n),
        out_shape=jax.ShapeDtypeStruct((1, 1), jnp.float32),
        in_specs=[
            pl.BlockSpec(memory_space=pltpu.MemorySpace.SMEM),   # logit_scale
            pl.BlockSpec((T, Dp), lambda i, j: (i, 0)),          # image rows
            text_spec,                                           # text (resident or tiled)
        ],
        out_specs=pl.BlockSpec(memory_space=pltpu.MemorySpace.SMEM),
        scratch_shapes=[
            pltpu.VMEM((T, 1), jnp.float32),      # row running max
            pltpu.VMEM((T, 1), jnp.float32),      # row running sum
            pltpu.VMEM((n, 1, T), jnp.float32),   # column running max (per column tile)
            pltpu.VMEM((n, 1, T), jnp.float32),   # column running sum (per column tile)
            pltpu.VMEM((1, 1), jnp.float32),      # sum of row logsumexps
            pltpu.VMEM((1, 1), jnp.float32),      # sum of column logsumexps
            pltpu.VMEM((1, 1), jnp.float32),      # trace (sum of target logits)
        ] + extra_scratch,
        compiler_params=pltpu.CompilerParams(
            dimension_semantics=("arbitrary", "arbitrary"),
            vmem_limit_bytes=vmem_limit),
    )(scale, image_features, text_features)
    return out[0, 0]


def clip_loss_ref(image_features, text_features, logit_scale):
    # pure-JAX reference mirroring the PyTorch module (world_size == 1)
    logits_per_image = logit_scale * image_features @ text_features.T
    logits_per_text = logit_scale * text_features @ image_features.T
    labels = jnp.arange(logits_per_image.shape[0])

    def ce(logits, labels):
        lse = jax.scipy.special.logsumexp(logits, axis=1)
        tgt = logits[jnp.arange(logits.shape[0]), labels]
        return jnp.mean(lse - tgt)

    return 0.5 * (ce(logits_per_image, labels) + ce(logits_per_text, labels))


if __name__ == "__main__":
    key = jax.random.PRNGKey(0)

    def make(k, b, d, dtype=jnp.float32):
        ki, kt = jax.random.split(k)
        img = jax.random.normal(ki, (b, d), jnp.float32)
        txt = jax.random.normal(kt, (b, d), jnp.float32)
        img = img / jnp.linalg.norm(img, axis=-1, keepdims=True)
        txt = txt / jnp.linalg.norm(txt, axis=-1, keepdims=True)
        # Round-trip through bf16 so the values are exactly representable and
        # the test does not depend on the MXU's f32-emulation precision.
        img = img.astype(jnp.bfloat16).astype(jnp.float32)
        txt = txt.astype(jnp.bfloat16).astype(jnp.float32)
        return img.astype(dtype), txt.astype(dtype)

    logit_scale = jnp.float32(14.285714)  # ~ exp(log(1 / 0.07))
    k1, k2, k3 = jax.random.split(key, 3)

    # 1) tiny f32 case: single tile, padded batch + feature dims, resident text
    img, txt = make(k1, 8, 32)
    got = jax.block_until_ready(clip_loss(img, txt, logit_scale))
    want = clip_loss_ref(img, txt, logit_scale)
    assert jnp.allclose(got, want, rtol=1e-4, atol=1e-4), ("case1", got, want)

    # 2) multi-tile f32, B and D not divisible by the tile, tiled-text fallback path
    img, txt = make(k2, 200, 160)
    got = jax.block_until_ready(
        clip_loss(img, txt, logit_scale, block_b=128, text_vmem_budget_bytes=0))
    want = clip_loss_ref(img, txt, logit_scale)
    assert jnp.allclose(got, want, rtol=1e-4, atol=1e-4), ("case2", got, want)

    # 3) multi-tile bf16 inputs, resident text, no padding mask
    img, txt = make(k3, 256, 128, dtype=jnp.bfloat16)
    got = jax.block_until_ready(clip_loss(img, txt, logit_scale, block_b=128))
    want = clip_loss_ref(img.astype(jnp.float32), txt.astype(jnp.float32), logit_scale)
    assert jnp.allclose(got, want, rtol=1e-3, atol=1e-3), ("case3", got, want)

    print("KERNEL_OK")
</pallas_src>

<mosaic_0001>
module attributes {stable_mosaic.version = 11 : i64} {
  func.func @_clip_loss_kernel(%arg0: i32, %arg1: i32, %arg2: memref<1x1xf32, #tpu.memory_space<smem>>, %arg3: memref<128x128xf32, #tpu.memory_space<vmem>>, %arg4: memref<128x128xf32, #tpu.memory_space<any>>, %arg5: memref<1x1xf32, #tpu.memory_space<smem>>, %arg6: memref<128x1xf32, #tpu.memory_space<vmem>>, %arg7: memref<128x1xf32, #tpu.memory_space<vmem>>, %arg8: memref<1x1x128xf32, #tpu.memory_space<vmem>>, %arg9: memref<1x1x128xf32, #tpu.memory_space<vmem>>, %arg10: memref<1x1xf32, #tpu.memory_space<vmem>>, %arg11: memref<1x1xf32, #tpu.memory_space<vmem>>, %arg12: memref<1x1xf32, #tpu.memory_space<vmem>>, %arg13: memref<128x128xf32, #tpu.memory_space<vmem>>) attributes {dimension_semantics = [#tpu.dimension_semantics<arbitrary>, #tpu.dimension_semantics<arbitrary>], iteration_bounds = array<i64: 1, 1>, scalar_prefetch = 0 : i64, scratch_operands = 8 : i64, tpu.core_type = #tpu.core_type<tc>, window_params = [{transform_indices = @transform_0, window_bounds = array<i64: 1, 1>}, {transform_indices = @transform_1, window_bounds = array<i64: 128, 128>}, {}, {transform_indices = @transform_3, window_bounds = array<i64: 1, 1>}]} {
    %c0_i32 = arith.constant 0 : i32
    %0 = arith.cmpi eq, %arg0, %c0_i32 : i32
    %c0_i32_0 = arith.constant 0 : i32
    %1 = arith.cmpi eq, %arg1, %c0_i32_0 : i32
    %2 = arith.andi %0, %1 : i1
    %3 = arith.extui %2 : i1 to i32
    %c0_i32_1 = arith.constant 0 : i32
    %4 = arith.cmpi ne, %3, %c0_i32_1 : i32
    scf.if %4 {
      "tpu.region"() ({
        %104 = tpu.sem_alloc : memref<!tpu.dma_semaphore, #tpu.memory_space<semaphore_mem>>
        tpu.enqueue_dma source(%arg4 : memref<128x128xf32, #tpu.memory_space<any>>) target(%arg13 : memref<128x128xf32, #tpu.memory_space<vmem>>) target_semaphore(%104 : memref<!tpu.dma_semaphore, #tpu.memory_space<semaphore_mem>>)
        tpu.wait_dma2 semaphore(%104 : memref<!tpu.dma_semaphore, #tpu.memory_space<semaphore_mem>>) src(%arg4 : memref<128x128xf32, #tpu.memory_space<any>>) dst(%arg13 : memref<128x128xf32, #tpu.memory_space<vmem>>)
        tpu.yield
      }) : () -> ()
      %cst_45 = arith.constant 0.000000e+00 : f32
      %98 = vector.broadcast %cst_45 : f32 to vector<1x1xf32>
      %c0_46 = arith.constant 0 : index
      %c0_47 = arith.constant 0 : index
      %99 = vector.load %arg10[%c0_46, %c0_47] : memref<1x1xf32, #tpu.memory_space<vmem>>, vector<1x1xf32>
      tpu.vector_store %arg10[%c0_46, %c0_47], %98 {strides = array<i32>} : memref<1x1xf32, #tpu.memory_space<vmem>>, vector<1x1xf32>,
      %cst_48 = arith.constant 0.000000e+00 : f32
      %100 = vector.broadcast %cst_48 : f32 to vector<1x1xf32>
      %c0_49 = arith.constant 0 : index
      %c0_50 = arith.constant 0 : index
      %101 = vector.load %arg11[%c0_49, %c0_50] : memref<1x1xf32, #tpu.memory_space<vmem>>, vector<1x1xf32>
      tpu.vector_store %arg11[%c0_49, %c0_50], %100 {strides = array<i32>} : memref<1x1xf32, #tpu.memory_space<vmem>>, vector<1x1xf32>,
      %cst_51 = arith.constant 0.000000e+00 : f32
      %102 = vector.broadcast %cst_51 : f32 to vector<1x1xf32>
      %c0_52 = arith.constant 0 : index
      %c0_53 = arith.constant 0 : index
      %103 = vector.load %arg12[%c0_52, %c0_53] : memref<1x1xf32, #tpu.memory_space<vmem>>, vector<1x1xf32>
      tpu.vector_store %arg12[%c0_52, %c0_53], %102 {strides = array<i32>} : memref<1x1xf32, #tpu.memory_space<vmem>>, vector<1x1xf32>,
    } else {
    }
    %c128_i32 = arith.constant 128 : i32
    %5 = arith.muli %arg1, %c128_i32 : i32
    %6 = tpu.assume_multiple %5, 128 : i32
    %7 = arith.index_cast %6 : i32 to index
    %c0 = arith.constant 0 : index
    %8 = vector.load %arg13[%7, %c0] : memref<128x128xf32, #tpu.memory_space<vmem>>, vector<128x128xf32>
    %c0_2 = arith.constant 0 : index
    %c0_3 = arith.constant 0 : index
    %9 = vector.load %arg3[%c0_2, %c0_3] : memref<128x128xf32, #tpu.memory_space<vmem>>, vector<128x128xf32>
    %cst = arith.constant dense<0.000000e+00> : vector<128x128xf32>
    %10 = tpu.matmul %9, %8, %cst {dimension_numbers = #tpu.dot_dimension_numbers<[1], [1], [0], [0], [0, 0, 1, 0], [], []>} : vector<128x128xf32>, vector<128x128xf32>, vector<128x128xf32> -> vector<128x128xf32>
    %c0_4 = arith.constant 0 : index
    %c0_5 = arith.constant 0 : index
    %11 = memref.load %arg2[%c0_4, %c0_5] : memref<1x1xf32, #tpu.memory_space<smem>>
    %12 = vector.broadcast %11 : f32 to vector<128x128xf32>
    %13 = arith.mulf %10, %12 : vector<128x128xf32>
    %c0_i32_6 = arith.constant 0 : i32
    %14 = arith.cmpi eq, %arg1, %c0_i32_6 : i32
    %15 = arith.extui %14 : i1 to i32
    %c0_i32_7 = arith.constant 0 : i32
    %16 = arith.cmpi ne, %15, %c0_i32_7 : i32
    scf.if %16 {
      %cst_45 = arith.constant -1.000000e+30 : f32
      %98 = vector.broadcast %cst_45 : f32 to vector<128x1xf32>
      %c0_46 = arith.constant 0 : index
      %c0_47 = arith.constant 0 : index
      %99 = vector.load %arg6[%c0_46, %c0_47] : memref<128x1xf32, #tpu.memory_space<vmem>>, vector<128x1xf32>
      tpu.vector_store %arg6[%c0_46, %c0_47], %98 {strides = array<i32>} : memref<128x1xf32, #tpu.memory_space<vmem>>, vector<128x1xf32>,
      %cst_48 = arith.constant 0.000000e+00 : f32
      %100 = vector.broadcast %cst_48 : f32 to vector<128x1xf32>
      %c0_49 = arith.constant 0 : index
      %c0_50 = arith.constant 0 : index
      %101 = vector.load %arg7[%c0_49, %c0_50] : memref<128x1xf32, #tpu.memory_space<vmem>>, vector<128x1xf32>
      tpu.vector_store %arg7[%c0_49, %c0_50], %100 {strides = array<i32>} : memref<128x1xf32, #tpu.memory_space<vmem>>, vector<128x1xf32>,
    } else {
    }
    %c0_i32_8 = arith.constant 0 : i32
    %17 = arith.cmpi eq, %arg0, %c0_i32_8 : i32
    %18 = arith.extui %17 : i1 to i32
    %c0_i32_9 = arith.constant 0 : i32
    %19 = arith.cmpi ne, %18, %c0_i32_9 : i32
    scf.if %19 {
      %cst_45 = arith.constant -1.000000e+30 : f32
      %98 = vector.broadcast %cst_45 : f32 to vector<1x128xf32>
      %99 = arith.index_cast %arg1 : i32 to index
      %c0_46 = arith.constant 0 : index
      %c0_47 = arith.constant 0 : index
      %100 = vector.load %arg8[%99, %c0_46, %c0_47] : memref<1x1x128xf32, #tpu.memory_space<vmem>>, vector<1x1x128xf32>
      %101 = vector.shape_cast %100 : vector<1x1x128xf32> to vector<1x128xf32>
      %102 = vector.shape_cast %98 : vector<1x128xf32> to vector<1x1x128xf32>
      tpu.vector_store %arg8[%99, %c0_46, %c0_47], %102 {strides = array<i32>} : memref<1x1x128xf32, #tpu.memory_space<vmem>>, vector<1x1x128xf32>,
      %cst_48 = arith.constant 0.000000e+00 : f32
      %103 = vector.broadcast %cst_48 : f32 to vector<1x128xf32>
      %104 = arith.index_cast %arg1 : i32 to index
      %c0_49 = arith.constant 0 : index
      %c0_50 = arith.constant 0 : index
      %105 = vector.load %arg9[%104, %c0_49, %c0_50] : memref<1x1x128xf32, #tpu.memory_space<vmem>>, vector<1x1x128xf32>
      %106 = vector.shape_cast %105 : vector<1x1x128xf32> to vector<1x128xf32>
      %107 = vector.shape_cast %103 : vector<1x128xf32> to vector<1x1x128xf32>
      tpu.vector_store %arg9[%104, %c0_49, %c0_50], %107 {strides = array<i32>} : memref<1x1x128xf32, #tpu.memory_space<vmem>>, vector<1x1x128xf32>,
    } else {
    }
    %20 = arith.cmpi eq, %arg0, %arg1 : i32
    %21 = arith.extui %20 : i1 to i32
    %c0_i32_10 = arith.constant 0 : i32
    %22 = arith.cmpi ne, %21, %c0_i32_10 : i32
    scf.if %22 {
      %98 = tpu.iota {dimensions = array<i32: 0>} : vector<128x128xi32>
      %99 = tpu.iota {dimensions = array<i32: 1>} : vector<128x128xi32>
      %c0_45 = arith.constant 0 : index
      %c0_46 = arith.constant 0 : index
      %100 = vector.load %arg12[%c0_45, %c0_46] : memref<1x1xf32, #tpu.memory_space<vmem>>, vector<1x1xf32>
      %101 = arith.cmpi eq, %98, %99 : vector<128x128xi32>
      %cst_47 = arith.constant 0.000000e+00 : f32
      %102 = vector.broadcast %cst_47 : f32 to vector<128x128xf32>
      %103 = arith.select %101, %13, %102 : vector<128x128xi1>, vector<128x128xf32>
      %104 = vector.shape_cast %103 : vector<128x128xf32> to vector<1x128x128xf32>
      %cst_48 = arith.constant dense<0.000000e+00> : vector<1xf32>
      %105 = vector.multi_reduction <add>, %104, %cst_48 [1, 2] : vector<1x128x128xf32> to vector<1xf32>
      %106 = vector.shape_cast %105 : vector<1xf32> to vector<1x1x1xf32>
      %107 = vector.extract %106[0, 0, 0] : f32 from vector<1x1x1xf32>
      %108 = vector.broadcast %107 : f32 to vector<1x1xf32>
      %109 = arith.addf %100, %108 : vector<1x1xf32>
      %c0_49 = arith.constant 0 : index
      %c0_50 = arith.constant 0 : index
      %110 = vector.load %arg12[%c0_49, %c0_50] : memref<1x1xf32, #tpu.memory_space<vmem>>, vector<1x1xf32>
      tpu.vector_store %arg12[%c0_49, %c0_50], %109 {strides = array<i32>} : memref<1x1xf32, #tpu.memory_space<vmem>>, vector<1x1xf32>,
    } else {
    }
    %c128_i32_11 = arith.constant 128 : i32
    %23 = arith.muli %arg0, %c128_i32_11 : i32
    %24 = tpu.iota {dimensions = array<i32: 0>} : vector<128x1xi32>
    %25 = vector.broadcast %23 : i32 to vector<128x1xi32>
    %26 = arith.addi %25, %24 : vector<128x1xi32>
    %c128_i32_12 = arith.constant 128 : i32
    %27 = arith.muli %arg1, %c128_i32_12 : i32
    %28 = tpu.iota {dimensions = array<i32: 1>} : vector<1x128xi32>
    %29 = vector.broadcast %27 : i32 to vector<1x128xi32>
    %30 = arith.addi %29, %28 : vector<1x128xi32>
    %c8_i32 = arith.constant 8 : i32
    %31 = vector.broadcast %c8_i32 : i32 to vector<128x1xi32>
    %32 = arith.cmpi slt, %26, %31 : vector<128x1xi32>
    %c8_i32_13 = arith.constant 8 : i32
    %33 = vector.broadcast %c8_i32_13 : i32 to vector<1x128xi32>
    %34 = arith.cmpi slt, %30, %33 : vector<1x128xi32>
    %cst_14 = arith.constant 0.000000e+00 : f32
    %cst_15 = arith.constant -1.000000e+30 : f32
    %35 = vector.broadcast %cst_14 : f32 to vector<128x1xf32>
    %36 = vector.broadcast %cst_15 : f32 to vector<128x1xf32>
    %37 = arith.select %32, %35, %36 : vector<128x1xi1>, vector<128x1xf32>
    %38 = vector.broadcast %37 : vector<128x1xf32> to vector<128x128xf32>
    %39 = arith.addf %13, %38 : vector<128x128xf32>
    %cst_16 = arith.constant 0.000000e+00 : f32
    %cst_17 = arith.constant -1.000000e+30 : f32
    %40 = vector.broadcast %cst_16 : f32 to vector<1x128xf32>
    %41 = vector.broadcast %cst_17 : f32 to vector<1x128xf32>
    %42 = arith.select %34, %40, %41 : vector<1x128xi1>, vector<1x128xf32>
    %43 = vector.broadcast %42 : vector<1x128xf32> to vector<128x128xf32>
    %44 = arith.addf %39, %43 : vector<128x128xf32>
    %c0_18 = arith.constant 0 : index
    %c0_19 = arith.constant 0 : index
    %45 = vector.load %arg6[%c0_18, %c0_19] : memref<128x1xf32, #tpu.memory_space<vmem>>, vector<128x1xf32>
    %cst_20 = arith.constant dense<0xFF800000> : vector<128xf32>
    %46 = vector.multi_reduction <maximumf>, %44, %cst_20 [1] : vector<128x128xf32> to vector<128xf32>
    %47 = vector.shape_cast %46 : vector<128xf32> to vector<128x1xf32>
    %48 = arith.maximumf %45, %47 : vector<128x1xf32>
    %49 = arith.subf %45, %48 : vector<128x1xf32>
    %50 = math.exp %49 : vector<128x1xf32>
    %c0_21 = arith.constant 0 : index
    %c0_22 = arith.constant 0 : index
    %51 = vector.load %arg7[%c0_21, %c0_22] : memref<128x1xf32, #tpu.memory_space<vmem>>, vector<128x1xf32>
    %52 = arith.mulf %50, %51 : vector<128x1xf32>
    %53 = vector.broadcast %48 : vector<128x1xf32> to vector<128x128xf32>
    %54 = arith.subf %44, %53 : vector<128x128xf32>
    %55 = math.exp %54 : vector<128x128xf32>
    %cst_23 = arith.constant dense<0.000000e+00> : vector<128xf32>
    %56 = vector.multi_reduction <add>, %55, %cst_23 [1] : vector<128x128xf32> to vector<128xf32>
    %57 = vector.shape_cast %56 : vector<128xf32> to vector<128x1xf32>
    %58 = arith.addf %52, %57 : vector<128x1xf32>
    %c0_24 = arith.constant 0 : index
    %c0_25 = arith.constant 0 : index
    %59 = vector.load %arg6[%c0_24, %c0_25] : memref<128x1xf32, #tpu.memory_space<vmem>>, vector<128x1xf32>
    tpu.vector_store %arg6[%c0_24, %c0_25], %48 {strides = array<i32>} : memref<128x1xf32, #tpu.memory_space<vmem>>, vector<128x1xf32>,
    %c0_26 = arith.constant 0 : index
    %c0_27 = arith.constant 0 : index
    %60 = vector.load %arg7[%c0_26, %c0_27] : memref<128x1xf32, #tpu.memory_space<vmem>>, vector<128x1xf32>
    tpu.vector_store %arg7[%c0_26, %c0_27], %58 {strides = array<i32>} : memref<128x1xf32, #tpu.memory_space<vmem>>, vector<128x1xf32>,
    %61 = arith.index_cast %arg1 : i32 to index
    %c0_28 = arith.constant 0 : index
    %c0_29 = arith.constant 0 : index
    %62 = vector.load %arg8[%61, %c0_28, %c0_29] : memref<1x1x128xf32, #tpu.memory_space<vmem>>, vector<1x1x128xf32>
    %63 = vector.shape_cast %62 : vector<1x1x128xf32> to vector<1x128xf32>
    %cst_30 = arith.constant dense<0xFF800000> : vector<128xf32>
    %64 = vector.multi_reduction <maximumf>, %44, %cst_30 [0] : vector<128x128xf32> to vector<128xf32>
    %65 = vector.shape_cast %64 : vector<128xf32> to vector<1x128xf32>
    %66 = arith.maximumf %63, %65 : vector<1x128xf32>
    %67 = arith.subf %63, %66 : vector<1x128xf32>
    %68 = math.exp %67 : vector<1x128xf32>
    %69 = arith.index_cast %arg1 : i32 to index
    %c0_31 = arith.constant 0 : index
    %c0_32 = arith.constant 0 : index
    %70 = vector.load %arg9[%69, %c0_31, %c0_32] : memref<1x1x128xf32, #tpu.memory_space<vmem>>, vector<1x1x128xf32>
    %71 = vector.shape_cast %70 : vector<1x1x128xf32> to vector<1x128xf32>
    %72 = arith.mulf %68, %71 : vector<1x128xf32>
    %73 = vector.broadcast %66 : vector<1x128xf32> to vector<128x128xf32>
    %74 = arith.subf %44, %73 : vector<128x128xf32>
    %75 = math.exp %74 : vector<128x128xf32>
    %cst_33 = arith.constant dense<0.000000e+00> : vector<128xf32>
    %76 = vector.multi_reduction <add>, %75, %cst_33 [0] : vector<128x128xf32> to vector<128xf32>
    %77 = vector.shape_cast %76 : vector<128xf32> to vector<1x128xf32>
    %78 = arith.addf %72, %77 : vector<1x128xf32>
    %79 = arith.index_cast %arg1 : i32 to index
    %c0_34 = arith.constant 0 : index
    %c0_35 = arith.constant 0 : index
    %80 = vector.load %arg8[%79, %c0_34, %c0_35] : memref<1x1x128xf32, #tpu.memory_space<vmem>>, vector<1x1x128xf32>
    %81 = vector.shape_cast %80 : vector<1x1x128xf32> to vector<1x128xf32>
    %82 = vector.shape_cast %66 : vector<1x128xf32> to vector<1x1x128xf32>
    tpu.vector_store %arg8[%79, %c0_34, %c0_35], %82 {strides = array<i32>} : memref<1x1x128xf32, #tpu.memory_space<vmem>>, vector<1x1x128xf32>,
    %83 = arith.index_cast %arg1 : i32 to index
    %c0_36 = arith.constant 0 : index
    %c0_37 = arith.constant 0 : index
    %84 = vector.load %arg9[%83, %c0_36, %c0_37] : memref<1x1x128xf32, #tpu.memory_space<vmem>>, vector<1x1x128xf32>
    %85 = vector.shape_cast %84 : vector<1x1x128xf32> to vector<1x128xf32>
    %86 = vector.shape_cast %78 : vector<1x128xf32> to vector<1x1x128xf32>
    tpu.vector_store %arg9[%83, %c0_36, %c0_37], %86 {strides = array<i32>} : memref<1x1x128xf32, #tpu.memory_space<vmem>>, vector<1x1x128xf32>,
    %c0_i32_38 = arith.constant 0 : i32
    %87 = arith.cmpi eq, %arg1, %c0_i32_38 : i32
    %88 = arith.extui %87 : i1 to i32
    %c0_i32_39 = arith.constant 0 : i32
    %89 = arith.cmpi ne, %88, %c0_i32_39 : i32
    scf.if %89 {
      %98 = math.log %58 : vector<128x1xf32>
      %99 = arith.addf %48, %98 : vector<128x1xf32>
      %cst_45 = arith.constant 0.000000e+00 : f32
      %100 = vector.broadcast %cst_45 : f32 to vector<128x1xf32>
      %101 = arith.select %32, %99, %100 : vector<128x1xi1>, vector<128x1xf32>
      %c0_46 = arith.constant 0 : index
      %c0_47 = arith.constant 0 : index
      %102 = vector.load %arg10[%c0_46, %c0_47] : memref<1x1xf32, #tpu.memory_space<vmem>>, vector<1x1xf32>
      %103 = vector.shape_cast %101 : vector<128x1xf32> to vector<1x128x1xf32>
      %cst_48 = arith.constant dense<0.000000e+00> : vector<1xf32>
      %104 = vector.multi_reduction <add>, %103, %cst_48 [1, 2] : vector<1x128x1xf32> to vector<1xf32>
      %105 = vector.shape_cast %104 : vector<1xf32> to vector<1x1x1xf32>
      %106 = vector.extract %105[0, 0, 0] : f32 from vector<1x1x1xf32>
      %107 = vector.broadcast %106 : f32 to vector<1x1xf32>
      %108 = arith.addf %102, %107 : vector<1x1xf32>
      %c0_49 = arith.constant 0 : index
      %c0_50 = arith.constant 0 : index
      %109 = vector.load %arg10[%c0_49, %c0_50] : memref<1x1xf32, #tpu.memory_space<vmem>>, vector<1x1xf32>
      tpu.vector_store %arg10[%c0_49, %c0_50], %108 {strides = array<i32>} : memref<1x1xf32, #tpu.memory_space<vmem>>, vector<1x1xf32>,
    } else {
    }
    %c0_i32_40 = arith.constant 0 : i32
    %90 = arith.cmpi eq, %arg0, %c0_i32_40 : i32
    %91 = arith.extui %90 : i1 to i32
    %c0_i32_41 = arith.constant 0 : i32
    %92 = arith.cmpi ne, %91, %c0_i32_41 : i32
    scf.if %92 {
      %98 = math.log %78 : vector<1x128xf32>
      %99 = arith.addf %66, %98 : vector<1x128xf32>
      %cst_45 = arith.constant 0.000000e+00 : f32
      %100 = vector.broadcast %cst_45 : f32 to vector<1x128xf32>
      %101 = arith.select %34, %99, %100 : vector<1x128xi1>, vector<1x128xf32>
      %c0_46 = arith.constant 0 : index
      %c0_47 = arith.constant 0 : index
      %102 = vector.load %arg11[%c0_46, %c0_47] : memref<1x1xf32, #tpu.memory_space<vmem>>, vector<1x1xf32>
      %103 = vector.shape_cast %101 : vector<1x128xf32> to vector<1x1x128xf32>
      %cst_48 = arith.constant dense<0.000000e+00> : vector<1xf32>
      %104 = vector.multi_reduction <add>, %103, %cst_48 [1, 2] : vector<1x1x128xf32> to vector<1xf32>
      %105 = vector.shape_cast %104 : vector<1xf32> to vector<1x1x1xf32>
      %106 = vector.extract %105[0, 0, 0] : f32 from vector<1x1x1xf32>
      %107 = vector.broadcast %106 : f32 to vector<1x1xf32>
      %108 = arith.addf %102, %107 : vector<1x1xf32>
      %c0_49 = arith.constant 0 : index
      %c0_50 = arith.constant 0 : index
      %109 = vector.load %arg11[%c0_49, %c0_50] : memref<1x1xf32, #tpu.memory_space<vmem>>, vector<1x1xf32>
      tpu.vector_store %arg11[%c0_49, %c0_50], %108 {strides = array<i32>} : memref<1x1xf32, #tpu.memory_space<vmem>>, vector<1x1xf32>,
    } else {
    }
    %c0_i32_42 = arith.constant 0 : i32
    %93 = arith.cmpi eq, %arg0, %c0_i32_42 : i32
    %c0_i32_43 = arith.constant 0 : i32
    %94 = arith.cmpi eq, %arg1, %c0_i32_43 : i32
    %95 = arith.andi %93, %94 : i1
    %96 = arith.extui %95 : i1 to i32
    %c0_i32_44 = arith.constant 0 : i32
    %97 = arith.cmpi ne, %96, %c0_i32_44 : i32
    scf.if %97 {
      %c0_45 = arith.constant 0 : index
      %c0_46 = arith.constant 0 : index
      %98 = vector.load %arg10[%c0_45, %c0_46] : memref<1x1xf32, #tpu.memory_space<vmem>>, vector<1x1xf32>
      %c0_47 = arith.constant 0 : index
      %c0_48 = arith.constant 0 : index
      %99 = vector.load %arg11[%c0_47, %c0_48] : memref<1x1xf32, #tpu.memory_space<vmem>>, vector<1x1xf32>
      %100 = arith.addf %98, %99 : vector<1x1xf32>
      %c0_49 = arith.constant 0 : index
      %c0_50 = arith.constant 0 : index
      %101 = vector.load %arg12[%c0_49, %c0_50] : memref<1x1xf32, #tpu.memory_space<vmem>>, vector<1x1xf32>
      %cst_51 = arith.constant 2.000000e+00 : f32
      %102 = vector.broadcast %cst_51 : f32 to vector<1x1xf32>
      %103 = arith.mulf %102, %101 : vector<1x1xf32>
      %104 = arith.subf %100, %103 : vector<1x1xf32>
      %cst_52 = arith.constant 6.250000e-02 : f32
      %105 = vector.broadcast %cst_52 : f32 to vector<1x1xf32>
      %106 = arith.mulf %104, %105 : vector<1x1xf32>
      %107 = vector.extract %106[0, 0] : f32 from vector<1x1xf32>
      %c0_53 = arith.constant 0 : index
      %c0_54 = arith.constant 0 : index
      %108 = memref.load %arg5[%c0_53, %c0_54] : memref<1x1xf32, #tpu.memory_space<smem>>
      memref.store %107, %arg5[%c0_53, %c0_54] : memref<1x1xf32, #tpu.memory_space<smem>>
    } else {
    }
    return
  }
  func.func @transform_0(%arg0: i32, %arg1: i32) -> (i32, i32) {
    %c0_i32 = arith.constant 0 : i32
    %c0_i32_0 = arith.constant 0 : i32
    %c0_i32_1 = arith.constant 0 : i32
    return %c0_i32, %c0_i32_0 : i32, i32
  }
  func.func @transform_1(%arg0: i32, %arg1: i32) -> (i32, i32) {
    %c0_i32 = arith.constant 0 : i32
    %c0_i32_0 = arith.constant 0 : i32
    return %arg0, %c0_i32 : i32, i32
  }
  func.func @transform_3(%arg0: i32, %arg1: i32) -> (i32, i32) {
    %c0_i32 = arith.constant 0 : i32
    %c0_i32_0 = arith.constant 0 : i32
    %c0_i32_1 = arith.constant 0 : i32
    return %c0_i32, %c0_i32_0 : i32, i32
  }
}

</mosaic_0001>

<llo_original>
// kernel: tpu_custom_call.1
$region0: #{tpu_custom_call.1}
  #allocation0 [shape = 'u32[]', space=smem, size = 0x4, offset = 0x4, fixed_abs, tag = 'smem constant byte address 0x4 - core index']
  #allocation1 [shape = 'u32[144,128]{1,0:T(1,128)}', space=vmem, size = 0x12000, scoped, tag = 'internal scratch']
  #allocation2 [shape = 'f32[128,1]{1,0:T(8,128)}', space=vmem, size = 0x10000, scoped, tag = 'scratch operand']
  #allocation3 [shape = 'f32[128,1]{1,0:T(8,128)}', space=vmem, size = 0x10000, scoped, tag = 'scratch operand']
  #allocation4 [shape = 'f32[1,1,128]{2,1,0:T(1,128)}', space=vmem, size = 0x200, scoped, tag = 'scratch operand']
  #allocation5 [shape = 'f32[1,1,128]{2,1,0:T(1,128)}', space=vmem, size = 0x200, scoped, tag = 'scratch operand']
  #allocation6 [shape = 'f32[1,1]{1,0:T(1,128)}', space=vmem, size = 0x200, scoped, tag = 'scratch operand']
  #allocation7 [shape = 'f32[1,1]{1,0:T(1,128)}', space=vmem, size = 0x200, scoped, tag = 'scratch operand']
  #allocation8 [shape = 'f32[1,1]{1,0:T(1,128)}', space=vmem, size = 0x200, scoped, tag = 'scratch operand']
  #allocation9 [shape = 'f32[128,128]{1,0:T(8,128)}', space=vmem, size = 0x10000, scoped, tag = 'scratch operand']
  #allocation10 [shape = 'f32[1,1]{1,0:T(1,128)S(6)}', space=smem, size = 0x200, scoped, tag = 'scoped memory for tpu_custom_call.1']
  #allocation16 [shape = 's32[]', space=sflag, size = 0x4, offset = 0, fixed_abs, tag = 'sflag constant byte address 0x0 - dummy sync flag']
  #allocation17 [shape = 's32[]', space=sflag, size = 0x4, offset = 0, fixed_abs, tag = 'sflag constant byte address 0x0 - dummy sync flag']
  #allocation18 [shape = 'u32[]', space=smem, size = 0x4, offset = 0x44, fixed_abs, tag = 'smem constant byte address 0x44 - assertion arg 0']
  #allocation19 [shape = 'u32[]', space=smem, size = 0x4, offset = 0x48, fixed_abs, tag = 'smem constant byte address 0x48 - assertion arg 1']
  %s0 = inlined_call_operand.<no memory space> [shape: f32[1,1], index: 0, kind: input, shape index: {}]
  %s1 = inlined_call_operand.hbm [shape: f32[128,128], index: 1, kind: input, shape index: {}]
  %s2 = inlined_call_operand.hbm [shape: f32[128,128], index: 2, kind: input, shape index: {}]
  %s3 = inlined_call_operand.hbm [shape: f32[1,1], index: 3, kind: output, shape index: {}]
  %s4 = sld [smem:[#allocation0]]
  $region55: #{tpu_custom_call.1} parent=0
    _
  %s6 = ssub.s32 1, %s4
  %s7 = scalar_select 0, %s6, %s4
  %8 = sst [smem:[#allocation10]] %s0
  $region1: #{tpu_custom_call.1} parent=0
    #allocation11 [shape = 'u8[65536]{0}', space=vmem, size = 0x10000, scoped, tag = 'input window, operand 1, single buffered']
    #allocation12 [shape = 's32[1]{0}', space=sflag, size = 0x4, scoped, tag = 'scoped memory for tpu_custom_call.1']
    #allocation13 [shape = 's32[1]{0}', space=sflag, size = 0x4, scoped, tag = 'scoped memory for tpu_custom_call.1']
    #allocation14 [shape = 'u8[512]{0}', space=smem, size = 0x200, scoped, tag = 'output window, operand 0, single buffered']
    %9 = vsyncpa [#allocation12], 0
    %10 = vsyncpa [#allocation13], 0
    // Predicated region
    $region2: #{tpu_custom_call.1} parent=1 // pred_check
      _
    $region3: #{tpu_custom_call.1} parent=1 // pred_check_branch
      %12 = sbr.rel (0) target = $region5
    $region4: #{tpu_custom_call.1} parent=1 // pred_region
      _
    $region5: #{tpu_custom_call.1} parent=1 // pred_fallthru
      _
    // Predicated region
    $region6: #{tpu_custom_call.1} parent=1 // pred_check
      _
    $region7: #{tpu_custom_call.1} parent=1 // pred_check_branch
      %14 = sbr.rel (0) target = $region9
    $region8: #{tpu_custom_call.1} parent=1 // pred_region
      %s16 = ssub.s32 2048, 2048
      %17 = vsyncadd [#allocation12], %s16
      %s18 = sshll.u32 [#allocation11], 4
      %s19 = int_to_ptr.vmem [resolvable:$true] %s18
      %24 = dma.hbm_to_vmem [thread:$0]  %s1, 2048, %s19, [#allocation12], 128, 128, 8
    $region9: #{tpu_custom_call.1} parent=1 // pred_fallthru
      _
    // Predicated region
    $region10: #{tpu_custom_call.1} parent=1 // pred_check
      _
    $region11: #{tpu_custom_call.1} parent=1 // pred_check_branch
      %26 = sbr.rel (0) target = $region13
    $region12: #{tpu_custom_call.1} parent=1 // pred_region
      %27 = dma.done [#allocation12], 2048
    $region13: #{tpu_custom_call.1} parent=1 // pred_fallthru
      _
    %p28 = scmp.eq.s32.totalorder 0, 0
    %p29 = scmp.eq.s32.totalorder 0, 0
    %p30 = pnand %p28, %p29
    %p31 = pneg %p30
    // Predicated region
    $region14: #{tpu_custom_call.1} parent=1 // pred_check
      _
    $region15: #{tpu_custom_call.1} parent=1 // pred_check_branch
      %33 = sbr.rel (%p30) target = $region17
    $region16: #{tpu_custom_call.1} parent=1 // pred_region
      $region18: #{tpu_custom_call.1} parent=16
        #allocation15 [shape = 's32[1]{0}', space=sflag, size = 0x4, scoped, tag = 'scoped memory for tpu_custom_call.1']
        // Predicated region
        $region19: #{tpu_custom_call.1} parent=18 // pred_check
          _
        $region20: #{tpu_custom_call.1} parent=18 // pred_check_branch
          %35 = sbr.rel target = $region22
        $region21: #{tpu_custom_call.1} parent=18 // pred_region
          %36 = sst [smem:[#allocation18]] [#allocation17]
          %37 = sst [smem:[#allocation19]] [#allocation16]
        $region22: #{tpu_custom_call.1} parent=18 // pred_fallthru
          _
        %39 = shalt.err (0)
        %s41 = sshll.u32 [#allocation9], 4
        %s42 = int_to_ptr.vmem [resolvable:$true] %s41
        %44 = dma.hbm_to_vmem [thread:$0]  %s2, 2048, %s42, [#allocation15]
        %s45 = smul.u32 128, 1
        %s46 = sshll.u32 %s45, 4
        %47 = dma.done [#allocation15], %s46
      %vm48 = vcmask 0
      %49 = vst.msk [vmem:[#allocation6] sm:$0x1] %vm48, 0.0
      %50 = vst.msk [vmem:[#allocation7] sm:$0x1] %vm48, 0.0
      %51 = vst.msk [vmem:[#allocation8] sm:$0x1] %vm48, 0.0
    $region17: #{tpu_custom_call.1} parent=1 // pred_fallthru
      _
    %s52 = smul.u32 0, 128
    %s53 = scalar_lea.vmem [#allocation9], %s52
    %v54 = vld [vmem:[%s53] sm:$0xff]
    %v55 = vld [vmem:[%s53 + $0x8] sm:$0xff]
    %v56 = vld [vmem:[%s53 + $0x10] sm:$0xff]
    %v57 = vld [vmem:[%s53 + $0x18] sm:$0xff]
    %v58 = vld [vmem:[%s53 + $0x20] sm:$0xff]
    %v59 = vld [vmem:[%s53 + $0x28] sm:$0xff]
    %v60 = vld [vmem:[%s53 + $0x30] sm:$0xff]
    %v61 = vld [vmem:[%s53 + $0x38] sm:$0xff]
    %v62 = vld [vmem:[%s53 + $0x40] sm:$0xff]
    %v63 = vld [vmem:[%s53 + $0x48] sm:$0xff]
    %v64 = vld [vmem:[%s53 + $0x50] sm:$0xff]
    %v65 = vld [vmem:[%s53 + $0x58] sm:$0xff]
    %v66 = vld [vmem:[%s53 + $0x60] sm:$0xff]
    %v67 = vld [vmem:[%s53 + $0x68] sm:$0xff]
    %v68 = vld [vmem:[%s53 + $0x70] sm:$0xff]
    %v69 = vld [vmem:[%s53 + $0x78] sm:$0xff]
    %v70 = vld [vmem:[#allocation11] sm:$0xff]
    %v71 = vld [vmem:[#allocation11 + $0x8] sm:$0xff]
    %v72 = vld [vmem:[#allocation11 + $0x10] sm:$0xff]
    %v73 = vld [vmem:[#allocation11 + $0x18] sm:$0xff]
    %v74 = vld [vmem:[#allocation11 + $0x20] sm:$0xff]
    %v75 = vld [vmem:[#allocation11 + $0x28] sm:$0xff]
    %v76 = vld [vmem:[#allocation11 + $0x30] sm:$0xff]
    %v77 = vld [vmem:[#allocation11 + $0x38] sm:$0xff]
    %v78 = vld [vmem:[#allocation11 + $0x40] sm:$0xff]
    %v79 = vld [vmem:[#allocation11 + $0x48] sm:$0xff]
    %v80 = vld [vmem:[#allocation11 + $0x50] sm:$0xff]
    %v81 = vld [vmem:[#allocation11 + $0x58] sm:$0xff]
    %v82 = vld [vmem:[#allocation11 + $0x60] sm:$0xff]
    %v83 = vld [vmem:[#allocation11 + $0x68] sm:$0xff]
    %v84 = vld [vmem:[#allocation11 + $0x70] sm:$0xff]
    %v85 = vld [vmem:[#allocation11 + $0x78] sm:$0xff]
    %86 = vmatprep.subr.mxu0 0.0
    %87 = vmatpush1.xpose.msra.mxu0 %v54
    %88 = vmatprep.subr.mxu0 0.0
    %89 = vmatpush1.xpose.msra.mxu0 %v55
    %90 = vmatprep.subr.mxu0 0.0
    %91 = vmatpush1.xpose.msra.mxu0 %v56
    %92 = vmatprep.subr.mxu0 0.0
    %93 = vmatpush1.xpose.msra.mxu0 %v57
    %94 = vmatprep.subr.mxu0 0.0
    %95 = vmatpush1.xpose.msra.mxu0 %v58
    %96 = vmatprep.subr.mxu0 0.0
    %97 = vmatpush1.xpose.msra.mxu0 %v59
    %98 = vmatprep.subr.mxu0 0.0
    %99 = vmatpush1.xpose.msra.mxu0 %v60
    %100 = vmatprep.subr.mxu0 0.0
    %101 = vmatpush1.xpose.msra.mxu0 %v61
    %102 = vmatprep.subr.mxu0 0.0
    %103 = vmatpush1.xpose.msra.mxu0 %v62
    %104 = vmatprep.subr.mxu0 0.0
    %105 = vmatpush1.xpose.msra.mxu0 %v63
    %106 = vmatprep.subr.mxu0 0.0
    %107 = vmatpush1.xpose.msra.mxu0 %v64
    %108 = vmatprep.subr.mxu0 0.0
    %109 = vmatpush1.xpose.msra.mxu0 %v65
    %110 = vmatprep.subr.mxu0 0.0
    %111 = vmatpush1.xpose.msra.mxu0 %v66
    %112 = vmatprep.subr.mxu0 0.0
    %113 = vmatpush1.xpose.msra.mxu0 %v67
    %114 = vmatprep.subr.mxu0 0.0
    %115 = vmatpush1.xpose.msra.mxu0 %v68
    %116 = vmatprep.subr.mxu0 0.0
    %117 = vmatpush1.xpose.msra.mxu0 %v69
    %118 = vmatprep.subr.mxu0 0.0
    %119 = vmatpush1.xpose.msra.mxu0 0.0
    %120 = vmatprep.subr.mxu0 0.0
    %121 = vmatpush1.xpose.msra.mxu0 0.0
    %122 = vmatprep.subr.mxu0 0.0
    %123 = vmatpush1.xpose.msra.mxu0 0.0
    %124 = vmatprep.subr.mxu0 0.0
    %125 = vmatpush1.xpose.msra.mxu0 0.0
    %126 = vmatprep.subr.mxu0 0.0
    %127 = vmatpush1.xpose.msra.mxu0 0.0
    %128 = vmatprep.subr.mxu0 0.0
    %129 = vmatpush1.xpose.msra.mxu0 0.0
    %130 = vmatprep.subr.mxu0 0.0
    %131 = vmatpush1.xpose.msra.mxu0 0.0
    %132 = vmatprep.subr.mxu0 0.0
    %133 = vmatpush1.xpose.msra.mxu0 0.0
    %134 = vmatprep.subr.mxu0 0.0
    %135 = vmatpush1.xpose.msra.mxu0 0.0
    %136 = vmatprep.subr.mxu0 0.0
    %137 = vmatpush1.xpose.msra.mxu0 0.0
    %138 = vmatprep.subr.mxu0 0.0
    %139 = vmatpush1.xpose.msra.mxu0 0.0
    %140 = vmatprep.subr.mxu0 0.0
    %141 = vmatpush1.xpose.msra.mxu0 0.0
    %142 = vmatprep.subr.mxu0 0.0
    %143 = vmatpush1.xpose.msra.mxu0 0.0
    %144 = vmatprep.subr.mxu0 0.0
    %145 = vmatpush1.xpose.msra.mxu0 0.0
    %146 = vmatprep.subr.mxu0 0.0
    %147 = vmatpush1.xpose.msra.mxu0 0.0
    %148 = vmatprep.subr.mxu0 0.0
    %149 = vmatpush1.xpose.msra.mxu0 0.0
    %150 = vmatprep.mubr.f32.mxu0 0.0
    %151 = vmatmul.mubr.f32.gmra.mrb[0].mxu0 %v70
    %v152 = vpop.f32.mrb[0].mxu0
    %v153 = vadd.f32 0.0, %v152
    %v154 = vpop.f32.mrb[0].mxu0
    %155 = vmatprep.mubr.f32.mxu0 0.0
    %156 = vmatmul.mubr.f32.gmra.mrb[0].mxu0 %v71
    %v157 = vpop.f32.mrb[0].mxu0
    %v158 = vadd.f32 0.0, %v157
    %v159 = vpop.f32.mrb[0].mxu0
    %160 = vmatprep.mubr.f32.mxu0 0.0
    %161 = vmatmul.mubr.f32.gmra.mrb[0].mxu0 %v72
    %v162 = vpop.f32.mrb[0].mxu0
    %v163 = vadd.f32 0.0, %v162
    %v164 = vpop.f32.mrb[0].mxu0
    %165 = vmatprep.mubr.f32.mxu0 0.0
    %166 = vmatmul.mubr.f32.gmra.mrb[0].mxu0 %v73
    %v167 = vpop.f32.mrb[0].mxu0
    %v168 = vadd.f32 0.0, %v167
    %v169 = vpop.f32.mrb[0].mxu0
    %170 = vmatprep.mubr.f32.mxu0 0.0
    %171 = vmatmul.mubr.f32.gmra.mrb[0].mxu0 %v74
    %v172 = vpop.f32.mrb[0].mxu0
    %v173 = vadd.f32 0.0, %v172
    %v174 = vpop.f32.mrb[0].mxu0
    %175 = vmatprep.mubr.f32.mxu0 0.0
    %176 = vmatmul.mubr.f32.gmra.mrb[0].mxu0 %v75
    %v177 = vpop.f32.mrb[0].mxu0
    %v178 = vadd.f32 0.0, %v177
    %v179 = vpop.f32.mrb[0].mxu0
    %180 = vmatprep.mubr.f32.mxu0 0.0
    %181 = vmatmul.mubr.f32.gmra.mrb[0].mxu0 %v76
    %v182 = vpop.f32.mrb[0].mxu0
    %v183 = vadd.f32 0.0, %v182
    %v184 = vpop.f32.mrb[0].mxu0
    %185 = vmatprep.mubr.f32.mxu0 0.0
    %186 = vmatmul.mubr.f32.gmra.mrb[0].mxu0 %v77
    %v187 = vpop.f32.mrb[0].mxu0
    %v188 = vadd.f32 0.0, %v187
    %v189 = vpop.f32.mrb[0].mxu0
    %190 = vmatprep.mubr.f32.mxu0 0.0
    %191 = vmatmul.mubr.f32.gmra.mrb[0].mxu0 %v78
    %v192 = vpop.f32.mrb[0].mxu0
    %v193 = vadd.f32 0.0, %v192
    %v194 = vpop.f32.mrb[0].mxu0
    %195 = vmatprep.mubr.f32.mxu0 0.0
    %196 = vmatmul.mubr.f32.gmra.mrb[0].mxu0 %v79
    %v197 = vpop.f32.mrb[0].mxu0
    %v198 = vadd.f32 0.0, %v197
    %v199 = vpop.f32.mrb[0].mxu0
    %200 = vmatprep.mubr.f32.mxu0 0.0
    %201 = vmatmul.mubr.f32.gmra.mrb[0].mxu0 %v80
    %v202 = vpop.f32.mrb[0].mxu0
    %v203 = vadd.f32 0.0, %v202
    %v204 = vpop.f32.mrb[0].mxu0
    %205 = vmatprep.mubr.f32.mxu0 0.0
    %206 = vmatmul.mubr.f32.gmra.mrb[0].mxu0 %v81
    %v207 = vpop.f32.mrb[0].mxu0
    %v208 = vadd.f32 0.0, %v207
    %v209 = vpop.f32.mrb[0].mxu0
    %210 = vmatprep.mubr.f32.mxu0 0.0
    %211 = vmatmul.mubr.f32.gmra.mrb[0].mxu0 %v82
    %v212 = vpop.f32.mrb[0].mxu0
    %v213 = vadd.f32 0.0, %v212
    %v214 = vpop.f32.mrb[0].mxu0
    %215 = vmatprep.mubr.f32.mxu0 0.0
    %216 = vmatmul.mubr.f32.gmra.mrb[0].mxu0 %v83
    %v217 = vpop.f32.mrb[0].mxu0
    %v218 = vadd.f32 0.0, %v217
    %v219 = vpop.f32.mrb[0].mxu0
    %220 = vmatprep.mubr.f32.mxu0 0.0
    %221 = vmatmul.mubr.f32.gmra.mrb[0].mxu0 %v84
    %v222 = vpop.f32.mrb[0].mxu0
    %v223 = vadd.f32 0.0, %v222
    %v224 = vpop.f32.mrb[0].mxu0
    %225 = vmatprep.mubr.f32.mxu0 0.0
    %226 = vmatmul.mubr.f32.gmra.mrb[0].mxu0 %v85
    %v227 = vpop.f32.mrb[0].mxu0
    %v228 = vadd.f32 0.0, %v227
    %v229 = vpop.f32.mrb[0].mxu0
    %230 = vdwg.mxu0
    %s231 = sld [smem:[#allocation10]]
    %v232 = vstv %s231
    %v233 = vmul.f32 %v153, %v232
    %v234 = vmul.f32 %v158, %v232
    %v235 = vmul.f32 %v163, %v232
    %v236 = vmul.f32 %v168, %v232
    %v237 = vmul.f32 %v173, %v232
    %v238 = vmul.f32 %v178, %v232
    %v239 = vmul.f32 %v183, %v232
    %v240 = vmul.f32 %v188, %v232
    %v241 = vmul.f32 %v193, %v232
    %v242 = vmul.f32 %v198, %v232
    %v243 = vmul.f32 %v203, %v232
    %v244 = vmul.f32 %v208, %v232
    %v245 = vmul.f32 %v213, %v232
    %v246 = vmul.f32 %v218, %v232
    %v247 = vmul.f32 %v223, %v232
    %v248 = vmul.f32 %v228, %v232
    // Predicated region
    $region23: #{tpu_custom_call.1} parent=1 // pred_check
      %p249 = pneg %p29
    $region24: #{tpu_custom_call.1} parent=1 // pred_check_branch
      %251 = sbr.rel (%p249) target = $region26
    $region25: #{tpu_custom_call.1} parent=1 // pred_region
      %vm252 = vcmask 7168
      %253 = vst.msk [vmem:[#allocation2] sm:$0xff] %vm252, -1e+30
      %254 = vst.msk [vmem:[#allocation2 + $0x8] sm:$0xff] %vm252, -1e+30
      %255 = vst.msk [vmem:[#allocation2 + $0x10] sm:$0xff] %vm252, -1e+30
      %256 = vst.msk [vmem:[#allocation2 + $0x18] sm:$0xff] %vm252, -1e+30
      %257 = vst.msk [vmem:[#allocation2 + $0x20] sm:$0xff] %vm252, -1e+30
      %258 = vst.msk [vmem:[#allocation2 + $0x28] sm:$0xff] %vm252, -1e+30
      %259 = vst.msk [vmem:[#allocation2 + $0x30] sm:$0xff] %vm252, -1e+30
      %260 = vst.msk [vmem:[#allocation2 + $0x38] sm:$0xff] %vm252, -1e+30
      %261 = vst.msk [vmem:[#allocation2 + $0x40] sm:$0xff] %vm252, -1e+30
      %262 = vst.msk [vmem:[#allocation2 + $0x48] sm:$0xff] %vm252, -1e+30
      %263 = vst.msk [vmem:[#allocation2 + $0x50] sm:$0xff] %vm252, -1e+30
      %264 = vst.msk [vmem:[#allocation2 + $0x58] sm:$0xff] %vm252, -1e+30
      %265 = vst.msk [vmem:[#allocation2 + $0x60] sm:$0xff] %vm252, -1e+30
      %266 = vst.msk [vmem:[#allocation2 + $0x68] sm:$0xff] %vm252, -1e+30
      %267 = vst.msk [vmem:[#allocation2 + $0x70] sm:$0xff] %vm252, -1e+30
      %268 = vst.msk [vmem:[#allocation2 + $0x78] sm:$0xff] %vm252, -1e+30
      %269 = vst.msk [vmem:[#allocation3] sm:$0xff] %vm252, 0.0
      %270 = vst.msk [vmem:[#allocation3 + $0x8] sm:$0xff] %vm252, 0.0
      %271 = vst.msk [vmem:[#allocation3 + $0x10] sm:$0xff] %vm252, 0.0
      %272 = vst.msk [vmem:[#allocation3 + $0x18] sm:$0xff] %vm252, 0.0
      %273 = vst.msk [vmem:[#allocation3 + $0x20] sm:$0xff] %vm252, 0.0
      %274 = vst.msk [vmem:[#allocation3 + $0x28] sm:$0xff] %vm252, 0.0
      %275 = vst.msk [vmem:[#allocation3 + $0x30] sm:$0xff] %vm252, 0.0
      %276 = vst.msk [vmem:[#allocation3 + $0x38] sm:$0xff] %vm252, 0.0
      %277 = vst.msk [vmem:[#allocation3 + $0x40] sm:$0xff] %vm252, 0.0
      %278 = vst.msk [vmem:[#allocation3 + $0x48] sm:$0xff] %vm252, 0.0
      %279 = vst.msk [vmem:[#allocation3 + $0x50] sm:$0xff] %vm252, 0.0
      %280 = vst.msk [vmem:[#allocation3 + $0x58] sm:$0xff] %vm252, 0.0
      %281 = vst.msk [vmem:[#allocation3 + $0x60] sm:$0xff] %vm252, 0.0
      %282 = vst.msk [vmem:[#allocation3 + $0x68] sm:$0xff] %vm252, 0.0
      %283 = vst.msk [vmem:[#allocation3 + $0x70] sm:$0xff] %vm252, 0.0
      %284 = vst.msk [vmem:[#allocation3 + $0x78] sm:$0xff] %vm252, 0.0
    $region26: #{tpu_custom_call.1} parent=1 // pred_fallthru
      _
    // Predicated region
    $region27: #{tpu_custom_call.1} parent=1 // pred_check
      %p285 = pneg %p28
    $region28: #{tpu_custom_call.1} parent=1 // pred_check_branch
      %287 = sbr.rel (%p285) target = $region30
    $region29: #{tpu_custom_call.1} parent=1 // pred_region
      %288 = vst [vmem:[#allocation4] sm:$0x1] -1e+30
      %289 = vst [vmem:[#allocation5] sm:$0x1] 0.0
    $region30: #{tpu_custom_call.1} parent=1 // pred_fallthru
      _
    %p290 = scmp.eq.s32.totalorder 0, 0
    // Predicated region
    $region31: #{tpu_custom_call.1} parent=1 // pred_check
      %p291 = pneg %p290
    $region32: #{tpu_custom_call.1} parent=1 // pred_check_branch
      %293 = sbr.rel (%p291) target = $region34
    $region33: #{tpu_custom_call.1} parent=1 // pred_region
      %v294 = vlaneseq
      %v295 = vshrl.u32 %v294, 7
      %v296 = vadd.s32 %v295, 8
      %v297 = vadd.s32 %v295, 16
      %v298 = vadd.s32 %v295, 24
      %v299 = vadd.s32 %v295, 32
      %v300 = vadd.s32 %v295, 40
      %v301 = vadd.s32 %v295, 48
      %v302 = vadd.s32 %v295, 56
      %v303 = vadd.s32 %v295, 64
      %v304 = vadd.s32 %v295, 72
      %v305 = vadd.s32 %v295, 80
      %v306 = vadd.s32 %v295, 88
      %v307 = vadd.s32 %v295, 96
      %v308 = vadd.s32 %v295, 104
      %v309 = vadd.s32 %v295, 112
      %v310 = vadd.s32 %v295, 120
      %v311 = vlaneseq
      %v312 = vand.u32 %v311, 127
      %v313 = vld [vmem:[#allocation8] sm:$0x1]
      %vm314 = vcmp.eq.s32.totalorder %v295, %v312
      %vm315 = vcmp.eq.s32.totalorder %v296, %v312
      %vm316 = vcmp.eq.s32.totalorder %v297, %v312
      %vm317 = vcmp.eq.s32.totalorder %v298, %v312
      %vm318 = vcmp.eq.s32.totalorder %v299, %v312
      %vm319 = vcmp.eq.s32.totalorder %v300, %v312
      %vm320 = vcmp.eq.s32.totalorder %v301, %v312
      %vm321 = vcmp.eq.s32.totalorder %v302, %v312
      %vm322 = vcmp.eq.s32.totalorder %v303, %v312
      %vm323 = vcmp.eq.s32.totalorder %v304, %v312
      %vm324 = vcmp.eq.s32.totalorder %v305, %v312
      %vm325 = vcmp.eq.s32.totalorder %v306, %v312
      %vm326 = vcmp.eq.s32.totalorder %v307, %v312
      %vm327 = vcmp.eq.s32.totalorder %v308, %v312
      %vm328 = vcmp.eq.s32.totalorder %v309, %v312
      %vm329 = vcmp.eq.s32.totalorder %v310, %v312
      %v330 = vsel %vm314, %v233, 0.0
      %v331 = vsel %vm315, %v234, 0.0
      %v332 = vsel %vm316, %v235, 0.0
      %v333 = vsel %vm317, %v236, 0.0
      %v334 = vsel %vm318, %v237, 0.0
      %v335 = vsel %vm319, %v238, 0.0
      %v336 = vsel %vm320, %v239, 0.0
      %v337 = vsel %vm321, %v240, 0.0
      %v338 = vsel %vm322, %v241, 0.0
      %v339 = vsel %vm323, %v242, 0.0
      %v340 = vsel %vm324, %v243, 0.0
      %v341 = vsel %vm325, %v244, 0.0
      %v342 = vsel %vm326, %v245, 0.0
      %v343 = vsel %vm327, %v246, 0.0
      %v344 = vsel %vm328, %v247, 0.0
      %v345 = vsel %vm329, %v248, 0.0
      %v346 = vadd.f32 %v330, %v331
      %v347 = vadd.f32 %v346, %v332
      %v348 = vadd.f32 %v347, %v333
      %v349 = vadd.f32 %v348, %v334
      %v350 = vadd.f32 %v349, %v335
      %v351 = vadd.f32 %v350, %v336
      %v352 = vadd.f32 %v351, %v337
      %v353 = vadd.f32 %v352, %v338
      %v354 = vadd.f32 %v353, %v339
      %v355 = vadd.f32 %v354, %v340
      %v356 = vadd.f32 %v355, %v341
      %v357 = vadd.f32 %v356, %v342
      %v358 = vadd.f32 %v357, %v343
      %v359 = vadd.f32 %v358, %v344
      %v360 = vadd.f32 %v359, %v345
      %361 = vadd.xlane.f32.xlu0 %v360
      %v362 = vpop.xlane.xlu0 %361
      %v363 = vrot.slane %v362, 4
      %v364 = vadd.f32 %v362, %v363
      %v365 = vrot.slane %v364, 2
      %v366 = vadd.f32 %v364, %v365
      %v367 = vrot.slane %v366, 1
      %v368 = vadd.f32 %v366, %v367
      %s369 = vtos %v368
      %v370 = vstv %s369
      %v371 = vadd.f32 %v313, %v370
      %vm372 = vcmask 0
      %373 = vst.msk [vmem:[#allocation8] sm:$0x1] %vm372, %v371
    $region34: #{tpu_custom_call.1} parent=1 // pred_fallthru
      _
    %s374 = smul.u32 0, 128
    %v375 = vlaneseq
    %v376 = vshrl.u32 %v375, 7
    %v377 = vadd.s32 %v376, 8
    %v378 = vadd.s32 %v376, 16
    %v379 = vadd.s32 %v376, 24
    %v380 = vadd.s32 %v376, 32
    %v381 = vadd.s32 %v376, 40
    %v382 = vadd.s32 %v376, 48
    %v383 = vadd.s32 %v376, 56
    %v384 = vadd.s32 %v376, 64
    %v385 = vadd.s32 %v376, 72
    %v386 = vadd.s32 %v376, 80
    %v387 = vadd.s32 %v376, 88
    %v388 = vadd.s32 %v376, 96
    %v389 = vadd.s32 %v376, 104
    %v390 = vadd.s32 %v376, 112
    %v391 = vadd.s32 %v376, 120
    %v392 = vstv %s374
    %v393 = vadd.s32 %v392, %v376
    %v394 = vadd.s32 %v392, %v377
    %v395 = vadd.s32 %v392, %v378
    %v396 = vadd.s32 %v392, %v379
    %v397 = vadd.s32 %v392, %v380
    %v398 = vadd.s32 %v392, %v381
    %v399 = vadd.s32 %v392, %v382
    %v400 = vadd.s32 %v392, %v383
    %v401 = vadd.s32 %v392, %v384
    %v402 = vadd.s32 %v392, %v385
    %v403 = vadd.s32 %v392, %v386
    %v404 = vadd.s32 %v392, %v387
    %v405 = vadd.s32 %v392, %v388
    %v406 = vadd.s32 %v392, %v389
    %v407 = vadd.s32 %v392, %v390
    %v408 = vadd.s32 %v392, %v391
    %v409 = vlaneseq
    %v410 = vand.u32 %v409, 127
    %v411 = vstv %s52
    %v412 = vadd.s32 %v411, %v410
    %vm413 = vcmp.lt.s32.totalorder %v393, 8
    %vm414 = vcmp.lt.s32.totalorder %v394, 8
    %vm415 = vcmp.lt.s32.totalorder %v395, 8
    %vm416 = vcmp.lt.s32.totalorder %v396, 8
    %vm417 = vcmp.lt.s32.totalorder %v397, 8
    %vm418 = vcmp.lt.s32.totalorder %v398, 8
    %vm419 = vcmp.lt.s32.totalorder %v399, 8
    %vm420 = vcmp.lt.s32.totalorder %v400, 8
    %vm421 = vcmp.lt.s32.totalorder %v401, 8
    %vm422 = vcmp.lt.s32.totalorder %v402, 8
    %vm423 = vcmp.lt.s32.totalorder %v403, 8
    %vm424 = vcmp.lt.s32.totalorder %v404, 8
    %vm425 = vcmp.lt.s32.totalorder %v405, 8
    %vm426 = vcmp.lt.s32.totalorder %v406, 8
    %vm427 = vcmp.lt.s32.totalorder %v407, 8
    %vm428 = vcmp.lt.s32.totalorder %v408, 8
    %vm429 = vcmp.lt.s32.totalorder %v412, 8
    %v430 = vsel %vm413, 0.0, -1e+30
    %v431 = vsel %vm414, 0.0, -1e+30
    %v432 = vsel %vm415, 0.0, -1e+30
    %v433 = vsel %vm416, 0.0, -1e+30
    %v434 = vsel %vm417, 0.0, -1e+30
    %v435 = vsel %vm418, 0.0, -1e+30
    %v436 = vsel %vm419, 0.0, -1e+30
    %v437 = vsel %vm420, 0.0, -1e+30
    %v438 = vsel %vm421, 0.0, -1e+30
    %v439 = vsel %vm422, 0.0, -1e+30
    %v440 = vsel %vm423, 0.0, -1e+30
    %v441 = vsel %vm424, 0.0, -1e+30
    %v442 = vsel %vm425, 0.0, -1e+30
    %v443 = vsel %vm426, 0.0, -1e+30
    %v444 = vsel %vm427, 0.0, -1e+30
    %v445 = vsel %vm428, 0.0, -1e+30
    %v446 = vadd.f32 %v233, %v430
    %v447 = vadd.f32 %v234, %v431
    %v448 = vadd.f32 %v235, %v432
    %v449 = vadd.f32 %v236, %v433
    %v450 = vadd.f32 %v237, %v434
    %v451 = vadd.f32 %v238, %v435
    %v452 = vadd.f32 %v239, %v436
    %v453 = vadd.f32 %v240, %v437
    %v454 = vadd.f32 %v241, %v438
    %v455 = vadd.f32 %v242, %v439
    %v456 = vadd.f32 %v243, %v440
    %v457 = vadd.f32 %v244, %v441
    %v458 = vadd.f32 %v245, %v442
    %v459 = vadd.f32 %v246, %v443
    %v460 = vadd.f32 %v247, %v444
    %v461 = vadd.f32 %v248, %v445
    %v462 = vsel %vm429, 0.0, -1e+30
    %v463 = vadd.f32 %v446, %v462
    %v464 = vadd.f32 %v447, %v462
    %v465 = vadd.f32 %v448, %v462
    %v466 = vadd.f32 %v449, %v462
    %v467 = vadd.f32 %v450, %v462
    %v468 = vadd.f32 %v451, %v462
    %v469 = vadd.f32 %v452, %v462
    %v470 = vadd.f32 %v453, %v462
    %v471 = vadd.f32 %v454, %v462
    %v472 = vadd.f32 %v455, %v462
    %v473 = vadd.f32 %v456, %v462
    %v474 = vadd.f32 %v457, %v462
    %v475 = vadd.f32 %v458, %v462
    %v476 = vadd.f32 %v459, %v462
    %v477 = vadd.f32 %v460, %v462
    %v478 = vadd.f32 %v461, %v462
    %v479 = vld [vmem:[#allocation2] sm:$0xff]
    %v480 = vld [vmem:[#allocation2 + $0x8] sm:$0xff]
    %v481 = vld [vmem:[#allocation2 + $0x10] sm:$0xff]
    %v482 = vld [vmem:[#allocation2 + $0x18] sm:$0xff]
    %v483 = vld [vmem:[#allocation2 + $0x20] sm:$0xff]
    %v484 = vld [vmem:[#allocation2 + $0x28] sm:$0xff]
    %v485 = vld [vmem:[#allocation2 + $0x30] sm:$0xff]
    %v486 = vld [vmem:[#allocation2 + $0x38] sm:$0xff]
    %v487 = vld [vmem:[#allocation2 + $0x40] sm:$0xff]
    %v488 = vld [vmem:[#allocation2 + $0x48] sm:$0xff]
    %v489 = vld [vmem:[#allocation2 + $0x50] sm:$0xff]
    %v490 = vld [vmem:[#allocation2 + $0x58] sm:$0xff]
    %v491 = vld [vmem:[#allocation2 + $0x60] sm:$0xff]
    %v492 = vld [vmem:[#allocation2 + $0x68] sm:$0xff]
    %v493 = vld [vmem:[#allocation2 + $0x70] sm:$0xff]
    %v494 = vld [vmem:[#allocation2 + $0x78] sm:$0xff]
    %495 = vmax.xlane.f32.xlu0 %v463
    %v496 = vpop.xlane.xlu0 %495
    %497 = vmax.xlane.f32.xlu0 %v464
    %v498 = vpop.xlane.xlu0 %497
    %499 = vmax.xlane.f32.xlu0 %v465
    %v500 = vpop.xlane.xlu0 %499
    %501 = vmax.xlane.f32.xlu0 %v466
    %v502 = vpop.xlane.xlu0 %501
    %503 = vmax.xlane.f32.xlu0 %v467
    %v504 = vpop.xlane.xlu0 %503
    %505 = vmax.xlane.f32.xlu0 %v468
    %v506 = vpop.xlane.xlu0 %505
    %507 = vmax.xlane.f32.xlu0 %v469
    %v508 = vpop.xlane.xlu0 %507
    %509 = vmax.xlane.f32.xlu0 %v470
    %v510 = vpop.xlane.xlu0 %509
    %511 = vmax.xlane.f32.xlu0 %v471
    %v512 = vpop.xlane.xlu0 %511
    %513 = vmax.xlane.f32.xlu0 %v472
    %v514 = vpop.xlane.xlu0 %513
    %515 = vmax.xlane.f32.xlu0 %v473
    %v516 = vpop.xlane.xlu0 %515
    %517 = vmax.xlane.f32.xlu0 %v474
    %v518 = vpop.xlane.xlu0 %517
    %519 = vmax.xlane.f32.xlu0 %v475
    %v520 = vpop.xlane.xlu0 %519
    %521 = vmax.xlane.f32.xlu0 %v476
    %v522 = vpop.xlane.xlu0 %521
    %523 = vmax.xlane.f32.xlu0 %v477
    %v524 = vpop.xlane.xlu0 %523
    %525 = vmax.xlane.f32.xlu0 %v478
    %v526 = vpop.xlane.xlu0 %525
    %v527 = vmax.f32 %v479, %v496
    %v528 = vmax.f32 %v480, %v498
    %v529 = vmax.f32 %v481, %v500
    %v530 = vmax.f32 %v482, %v502
    %v531 = vmax.f32 %v483, %v504
    %v532 = vmax.f32 %v484, %v506
    %v533 = vmax.f32 %v485, %v508
    %v534 = vmax.f32 %v486, %v510
    %v535 = vmax.f32 %v487, %v512
    %v536 = vmax.f32 %v488, %v514
    %v537 = vmax.f32 %v489, %v516
    %v538 = vmax.f32 %v490, %v518
    %v539 = vmax.f32 %v491, %v520
    %v540 = vmax.f32 %v492, %v522
    %v541 = vmax.f32 %v493, %v524
    %v542 = vmax.f32 %v494, %v526
    %v543 = vsub.f32 %v479, %v527
    %v544 = vsub.f32 %v480, %v528
    %v545 = vsub.f32 %v481, %v529
    %v546 = vsub.f32 %v482, %v530
    %v547 = vsub.f32 %v483, %v531
    %v548 = vsub.f32 %v484, %v532
    %v549 = vsub.f32 %v485, %v533
    %v550 = vsub.f32 %v486, %v534
    %v551 = vsub.f32 %v487, %v535
    %v552 = vsub.f32 %v488, %v536
    %v553 = vsub.f32 %v489, %v537
    %v554 = vsub.f32 %v490, %v538
    %v555 = vsub.f32 %v491, %v539
    %v556 = vsub.f32 %v492, %v540
    %v557 = vsub.f32 %v493, %v541
    %v558 = vsub.f32 %v494, %v542
    %v559 = vmul.f32 %v543, 1.442695
    %v560 = vpow.pop %v559
    %v561 = vmul.f32 %v544, 1.442695
    %v562 = vpow.pop %v561
    %v563 = vmul.f32 %v545, 1.442695
    %v564 = vpow.pop %v563
    %v565 = vmul.f32 %v546, 1.442695
    %v566 = vpow.pop %v565
    %v567 = vmul.f32 %v547, 1.442695
    %v568 = vpow.pop %v567
    %v569 = vmul.f32 %v548, 1.442695
    %v570 = vpow.pop %v569
    %v571 = vmul.f32 %v549, 1.442695
    %v572 = vpow.pop %v571
    %v573 = vmul.f32 %v550, 1.442695
    %v574 = vpow.pop %v573
    %v575 = vmul.f32 %v551, 1.442695
    %v576 = vpow.pop %v575
    %v577 = vmul.f32 %v552, 1.442695
    %v578 = vpow.pop %v577
    %v579 = vmul.f32 %v553, 1.442695
    %v580 = vpow.pop %v579
    %v581 = vmul.f32 %v554, 1.442695
    %v582 = vpow.pop %v581
    %v583 = vmul.f32 %v555, 1.442695
    %v584 = vpow.pop %v583
    %v585 = vmul.f32 %v556, 1.442695
    %v586 = vpow.pop %v585
    %v587 = vmul.f32 %v557, 1.442695
    %v588 = vpow.pop %v587
    %v589 = vmul.f32 %v558, 1.442695
    %v590 = vpow.pop %v589
    %v591 = vld [vmem:[#allocation3] sm:$0xff]
    %v592 = vld [vmem:[#allocation3 + $0x8] sm:$0xff]
    %v593 = vld [vmem:[#allocation3 + $0x10] sm:$0xff]
    %v594 = vld [vmem:[#allocation3 + $0x18] sm:$0xff]
    %v595 = vld [vmem:[#allocation3 + $0x20] sm:$0xff]
    %v596 = vld [vmem:[#allocation3 + $0x28] sm:$0xff]
    %v597 = vld [vmem:[#allocation3 + $0x30] sm:$0xff]
    %v598 = vld [vmem:[#allocation3 + $0x38] sm:$0xff]
    %v599 = vld [vmem:[#allocation3 + $0x40] sm:$0xff]
    %v600 = vld [vmem:[#allocation3 + $0x48] sm:$0xff]
    %v601 = vld [vmem:[#allocation3 + $0x50] sm:$0xff]
    %v602 = vld [vmem:[#allocation3 + $0x58] sm:$0xff]
    %v603 = vld [vmem:[#allocation3 + $0x60] sm:$0xff]
    %v604 = vld [vmem:[#allocation3 + $0x68] sm:$0xff]
    %v605 = vld [vmem:[#allocation3 + $0x70] sm:$0xff]
    %v606 = vld [vmem:[#allocation3 + $0x78] sm:$0xff]
    %v607 = vmul.f32 %v560, %v591
    %v608 = vmul.f32 %v562, %v592
    %v609 = vmul.f32 %v564, %v593
    %v610 = vmul.f32 %v566, %v594
    %v611 = vmul.f32 %v568, %v595
    %v612 = vmul.f32 %v570, %v596
    %v613 = vmul.f32 %v572, %v597
    %v614 = vmul.f32 %v574, %v598
    %v615 = vmul.f32 %v576, %v599
    %v616 = vmul.f32 %v578, %v600
    %v617 = vmul.f32 %v580, %v601
    %v618 = vmul.f32 %v582, %v602
    %v619 = vmul.f32 %v584, %v603
    %v620 = vmul.f32 %v586, %v604
    %v621 = vmul.f32 %v588, %v605
    %v622 = vmul.f32 %v590, %v606
    %624 = vset.pattern.permute.xlu0 0
    %625 = vperm.xlu0 %624, %v527
    %v626 = vpop.permute.xlu0 %625
    %629 = vset.pattern.permute.xlu0 0
    %630 = vperm.xlu0 %629, %v528
    %v631 = vpop.permute.xlu0 %630
    %634 = vset.pattern.permute.xlu0 0
    %635 = vperm.xlu0 %634, %v529
    %v636 = vpop.permute.xlu0 %635
    %639 = vset.pattern.permute.xlu0 0
    %640 = vperm.xlu0 %639, %v530
    %v641 = vpop.permute.xlu0 %640
    %644 = vset.pattern.permute.xlu0 0
    %645 = vperm.xlu0 %644, %v531
    %v646 = vpop.permute.xlu0 %645
    %649 = vset.pattern.permute.xlu0 0
    %650 = vperm.xlu0 %649, %v532
    %v651 = vpop.permute.xlu0 %650
    %654 = vset.pattern.permute.xlu0 0
    %655 = vperm.xlu0 %654, %v533
    %v656 = vpop.permute.xlu0 %655
    %659 = vset.pattern.permute.xlu0 0
    %660 = vperm.xlu0 %659, %v534
    %v661 = vpop.permute.xlu0 %660
    %664 = vset.pattern.permute.xlu0 0
    %665 = vperm.xlu0 %664, %v535
    %v666 = vpop.permute.xlu0 %665
    %669 = vset.pattern.permute.xlu0 0
    %670 = vperm.xlu0 %669, %v536
    %v671 = vpop.permute.xlu0 %670
    %674 = vset.pattern.permute.xlu0 0
    %675 = vperm.xlu0 %674, %v537
    %v676 = vpop.permute.xlu0 %675
    %679 = vset.pattern.permute.xlu0 0
    %680 = vperm.xlu0 %679, %v538
    %v681 = vpop.permute.xlu0 %680
    %684 = vset.pattern.permute.xlu0 0
    %685 = vperm.xlu0 %684, %v539
    %v686 = vpop.permute.xlu0 %685
    %689 = vset.pattern.permute.xlu0 0
    %690 = vperm.xlu0 %689, %v540
    %v691 = vpop.permute.xlu0 %690
    %694 = vset.pattern.permute.xlu0 0
    %695 = vperm.xlu0 %694, %v541
    %v696 = vpop.permute.xlu0 %695
    %699 = vset.pattern.permute.xlu0 0
    %700 = vperm.xlu0 %699, %v542
    %v701 = vpop.permute.xlu0 %700
    %v703 = vsub.f32 %v463, %v626
    %v704 = vsub.f32 %v464, %v631
    %v705 = vsub.f32 %v465, %v636
    %v706 = vsub.f32 %v466, %v641
    %v707 = vsub.f32 %v467, %v646
    %v708 = vsub.f32 %v468, %v651
    %v709 = vsub.f32 %v469, %v656
    %v710 = vsub.f32 %v470, %v661
    %v711 = vsub.f32 %v471, %v666
    %v712 = vsub.f32 %v472, %v671
    %v713 = vsub.f32 %v473, %v676
    %v714 = vsub.f32 %v474, %v681
    %v715 = vsub.f32 %v475, %v686
    %v716 = vsub.f32 %v476, %v691
    %v717 = vsub.f32 %v477, %v696
    %v718 = vsub.f32 %v478, %v701
    %v719 = vmul.f32 %v703, 1.442695
    %v720 = vpow.pop %v719
    %v721 = vmul.f32 %v704, 1.442695
    %v722 = vpow.pop %v721
    %v723 = vmul.f32 %v705, 1.442695
    %v724 = vpow.pop %v723
    %v725 = vmul.f32 %v706, 1.442695
    %v726 = vpow.pop %v725
    %v727 = vmul.f32 %v707, 1.442695
    %v728 = vpow.pop %v727
    %v729 = vmul.f32 %v708, 1.442695
    %v730 = vpow.pop %v729
    %v731 = vmul.f32 %v709, 1.442695
    %v732 = vpow.pop %v731
    %v733 = vmul.f32 %v710, 1.442695
    %v734 = vpow.pop %v733
    %v735 = vmul.f32 %v711, 1.442695
    %v736 = vpow.pop %v735
    %v737 = vmul.f32 %v712, 1.442695
    %v738 = vpow.pop %v737
    %v739 = vmul.f32 %v713, 1.442695
    %v740 = vpow.pop %v739
    %v741 = vmul.f32 %v714, 1.442695
    %v742 = vpow.pop %v741
    %v743 = vmul.f32 %v715, 1.442695
    %v744 = vpow.pop %v743
    %v745 = vmul.f32 %v716, 1.442695
    %v746 = vpow.pop %v745
    %v747 = vmul.f32 %v717, 1.442695
    %v748 = vpow.pop %v747
    %v749 = vmul.f32 %v718, 1.442695
    %v750 = vpow.pop %v749
    %751 = vadd.xlane.f32.xlu0 %v720
    %v752 = vpop.xlane.xlu0 %751
    %753 = vadd.xlane.f32.xlu0 %v722
    %v754 = vpop.xlane.xlu0 %753
    %755 = vadd.xlane.f32.xlu0 %v724
    %v756 = vpop.xlane.xlu0 %755
    %757 = vadd.xlane.f32.xlu0 %v726
    %v758 = vpop.xlane.xlu0 %757
    %759 = vadd.xlane.f32.xlu0 %v728
    %v760 = vpop.xlane.xlu0 %759
    %761 = vadd.xlane.f32.xlu0 %v730
    %v762 = vpop.xlane.xlu0 %761
    %763 = vadd.xlane.f32.xlu0 %v732
    %v764 = vpop.xlane.xlu0 %763
    %765 = vadd.xlane.f32.xlu0 %v734
    %v766 = vpop.xlane.xlu0 %765
    %767 = vadd.xlane.f32.xlu0 %v736
    %v768 = vpop.xlane.xlu0 %767
    %769 = vadd.xlane.f32.xlu0 %v738
    %v770 = vpop.xlane.xlu0 %769
    %771 = vadd.xlane.f32.xlu0 %v740
    %v772 = vpop.xlane.xlu0 %771
    %773 = vadd.xlane.f32.xlu0 %v742
    %v774 = vpop.xlane.xlu0 %773
    %775 = vadd.xlane.f32.xlu0 %v744
    %v776 = vpop.xlane.xlu0 %775
    %777 = vadd.xlane.f32.xlu0 %v746
    %v778 = vpop.xlane.xlu0 %777
    %779 = vadd.xlane.f32.xlu0 %v748
    %v780 = vpop.xlane.xlu0 %779
    %781 = vadd.xlane.f32.xlu0 %v750
    %v782 = vpop.xlane.xlu0 %781
    %v783 = vadd.f32 %v607, %v752
    %v784 = vadd.f32 %v608, %v754
    %v785 = vadd.f32 %v609, %v756
    %v786 = vadd.f32 %v610, %v758
    %v787 = vadd.f32 %v611, %v760
    %v788 = vadd.f32 %v612, %v762
    %v789 = vadd.f32 %v613, %v764
    %v790 = vadd.f32 %v614, %v766
    %v791 = vadd.f32 %v615, %v768
    %v792 = vadd.f32 %v616, %v770
    %v793 = vadd.f32 %v617, %v772
    %v794 = vadd.f32 %v618, %v774
    %v795 = vadd.f32 %v619, %v776
    %v796 = vadd.f32 %v620, %v778
    %v797 = vadd.f32 %v621, %v780
    %v798 = vadd.f32 %v622, %v782
    %vm799 = vcmask 7168
    %800 = vst.msk [vmem:[#allocation2] sm:$0xff] %vm799, %v527
    %801 = vst.msk [vmem:[#allocation2 + $0x8] sm:$0xff] %vm799, %v528
    %802 = vst.msk [vmem:[#allocation2 + $0x10] sm:$0xff] %vm799, %v529
    %803 = vst.msk [vmem:[#allocation2 + $0x18] sm:$0xff] %vm799, %v530
    %804 = vst.msk [vmem:[#allocation2 + $0x20] sm:$0xff] %vm799, %v531
    %805 = vst.msk [vmem:[#allocation2 + $0x28] sm:$0xff] %vm799, %v532
    %806 = vst.msk [vmem:[#allocation2 + $0x30] sm:$0xff] %vm799, %v533
    %807 = vst.msk [vmem:[#allocation2 + $0x38] sm:$0xff] %vm799, %v534
    %808 = vst.msk [vmem:[#allocation2 + $0x40] sm:$0xff] %vm799, %v535
    %809 = vst.msk [vmem:[#allocation2 + $0x48] sm:$0xff] %vm799, %v536
    %810 = vst.msk [vmem:[#allocation2 + $0x50] sm:$0xff] %vm799, %v537
    %811 = vst.msk [vmem:[#allocation2 + $0x58] sm:$0xff] %vm799, %v538
    %812 = vst.msk [vmem:[#allocation2 + $0x60] sm:$0xff] %vm799, %v539
    %813 = vst.msk [vmem:[#allocation2 + $0x68] sm:$0xff] %vm799, %v540
    %814 = vst.msk [vmem:[#allocation2 + $0x70] sm:$0xff] %vm799, %v541
    %815 = vst.msk [vmem:[#allocation2 + $0x78] sm:$0xff] %vm799, %v542
    %816 = vst.msk [vmem:[#allocation3] sm:$0xff] %vm799, %v783
    %817 = vst.msk [vmem:[#allocation3 + $0x8] sm:$0xff] %vm799, %v784
    %818 = vst.msk [vmem:[#allocation3 + $0x10] sm:$0xff] %vm799, %v785
    %819 = vst.msk [vmem:[#allocation3 + $0x18] sm:$0xff] %vm799, %v786
    %820 = vst.msk [vmem:[#allocation3 + $0x20] sm:$0xff] %vm799, %v787
    %821 = vst.msk [vmem:[#allocation3 + $0x28] sm:$0xff] %vm799, %v788
    %822 = vst.msk [vmem:[#allocation3 + $0x30] sm:$0xff] %vm799, %v789
    %823 = vst.msk [vmem:[#allocation3 + $0x38] sm:$0xff] %vm799, %v790
    %824 = vst.msk [vmem:[#allocation3 + $0x40] sm:$0xff] %vm799, %v791
    %825 = vst.msk [vmem:[#allocation3 + $0x48] sm:$0xff] %vm799, %v792
    %826 = vst.msk [vmem:[#allocation3 + $0x50] sm:$0xff] %vm799, %v793
    %827 = vst.msk [vmem:[#allocation3 + $0x58] sm:$0xff] %vm799, %v794
    %828 = vst.msk [vmem:[#allocation3 + $0x60] sm:$0xff] %vm799, %v795
    %829 = vst.msk [vmem:[#allocation3 + $0x68] sm:$0xff] %vm799, %v796
    %830 = vst.msk [vmem:[#allocation3 + $0x70] sm:$0xff] %vm799, %v797
    %831 = vst.msk [vmem:[#allocation3 + $0x78] sm:$0xff] %vm799, %v798
    %v832 = vld [vmem:[#allocation4] sm:$0x1]
    %v833 = vmax.f32 %v463, %v467
    %v834 = vmax.f32 %v464, %v468
    %v835 = vmax.f32 %v465, %v469
    %v836 = vmax.f32 %v466, %v470
    %v837 = vmax.f32 %v833, %v471
    %v838 = vmax.f32 %v834, %v472
    %v839 = vmax.f32 %v835, %v473
    %v840 = vmax.f32 %v836, %v474
    %v841 = vmax.f32 %v837, %v475
    %v842 = vmax.f32 %v838, %v476
    %v843 = vmax.f32 %v839, %v477
    %v844 = vmax.f32 %v840, %v478
    %v845 = vmax.f32 %v841, %v842
    %v846 = vmax.f32 %v843, %v844
    %v847 = vmax.f32 %v845, %v846
    %v848 = vrot.slane %v847, 4
    %v849 = vmax.f32 %v847, %v848
    %v850 = vrot.slane %v849, 2
    %v851 = vmax.f32 %v849, %v850
    %v852 = vrot.slane %v851, 1
    %v853 = vmax.f32 %v851, %v852
    %v854 = vmax.f32 %v832, %v853
    %v855 = vsub.f32 %v832, %v854
    %v856 = vmul.f32 %v855, 1.442695
    %v857 = vpow.pop %v856
    %v858 = vld [vmem:[#allocation5] sm:$0x1]
    %v859 = vmul.f32 %v857, %v858
    %v861 = vlaneseq
    %v862 = vshrl.u32 %v861, 7
    %v863 = vsub.s32 0, %v862
    %v864 = vrot.slane %v854, %v863
    %v866 = vsub.f32 %v463, %v864
    %v867 = vsub.f32 %v464, %v864
    %v868 = vsub.f32 %v465, %v864
    %v869 = vsub.f32 %v466, %v864
    %v870 = vsub.f32 %v467, %v864
    %v871 = vsub.f32 %v468, %v864
    %v872 = vsub.f32 %v469, %v864
    %v873 = vsub.f32 %v470, %v864
    %v874 = vsub.f32 %v471, %v864
    %v875 = vsub.f32 %v472, %v864
    %v876 = vsub.f32 %v473, %v864
    %v877 = vsub.f32 %v474, %v864
    %v878 = vsub.f32 %v475, %v864
    %v879 = vsub.f32 %v476, %v864
    %v880 = vsub.f32 %v477, %v864
    %v881 = vsub.f32 %v478, %v864
    %v882 = vmul.f32 %v866, 1.442695
    %v883 = vpow.pop %v882
    %v884 = vmul.f32 %v867, 1.442695
    %v885 = vpow.pop %v884
    %v886 = vmul.f32 %v868, 1.442695
    %v887 = vpow.pop %v886
    %v888 = vmul.f32 %v869, 1.442695
    %v889 = vpow.pop %v888
    %v890 = vmul.f32 %v870, 1.442695
    %v891 = vpow.pop %v890
    %v892 = vmul.f32 %v871, 1.442695
    %v893 = vpow.pop %v892
    %v894 = vmul.f32 %v872, 1.442695
    %v895 = vpow.pop %v894
    %v896 = vmul.f32 %v873, 1.442695
    %v897 = vpow.pop %v896
    %v898 = vmul.f32 %v874, 1.442695
    %v899 = vpow.pop %v898
    %v900 = vmul.f32 %v875, 1.442695
    %v901 = vpow.pop %v900
    %v902 = vmul.f32 %v876, 1.442695
    %v903 = vpow.pop %v902
    %v904 = vmul.f32 %v877, 1.442695
    %v905 = vpow.pop %v904
    %v906 = vmul.f32 %v878, 1.442695
    %v907 = vpow.pop %v906
    %v908 = vmul.f32 %v879, 1.442695
    %v909 = vpow.pop %v908
    %v910 = vmul.f32 %v880, 1.442695
    %v911 = vpow.pop %v910
    %v912 = vmul.f32 %v881, 1.442695
    %v913 = vpow.pop %v912
    %v914 = vadd.f32 %v883, %v885
    %v915 = vadd.f32 %v914, %v887
    %v916 = vadd.f32 %v915, %v889
    %v917 = vadd.f32 %v916, %v891
    %v918 = vadd.f32 %v917, %v893
    %v919 = vadd.f32 %v918, %v895
    %v920 = vadd.f32 %v919, %v897
    %v921 = vadd.f32 %v920, %v899
    %v922 = vadd.f32 %v921, %v901
    %v923 = vadd.f32 %v922, %v903
    %v924 = vadd.f32 %v923, %v905
    %v925 = vadd.f32 %v924, %v907
    %v926 = vadd.f32 %v925, %v909
    %v927 = vadd.f32 %v926, %v911
    %v928 = vadd.f32 %v927, %v913
    %v929 = vrot.slane %v928, 4
    %v930 = vadd.f32 %v928, %v929
    %v931 = vrot.slane %v930, 2
    %v932 = vadd.f32 %v930, %v931
    %v933 = vrot.slane %v932, 1
    %v934 = vadd.f32 %v932, %v933
    %v935 = vadd.f32 %v859, %v934
    %936 = vst [vmem:[#allocation4] sm:$0x1] %v854
    %937 = vst [vmem:[#allocation5] sm:$0x1] %v935
    // Predicated region
    $region35: #{tpu_custom_call.1} parent=1 // pred_check
      %p938 = pneg %p29
    $region36: #{tpu_custom_call.1} parent=1 // pred_check_branch
      %940 = sbr.rel (%p938) target = $region38
    $region37: #{tpu_custom_call.1} parent=1 // pred_region
      %v941 = vlog2.pop %v783
      %v942 = vmul.f32 %v941, 0.6931472
      %v943 = vlog2.pop %v784
      %v944 = vmul.f32 %v943, 0.6931472
      %v945 = vlog2.pop %v785
      %v946 = vmul.f32 %v945, 0.6931472
      %v947 = vlog2.pop %v786
      %v948 = vmul.f32 %v947, 0.6931472
      %v949 = vlog2.pop %v787
      %v950 = vmul.f32 %v949, 0.6931472
      %v951 = vlog2.pop %v788
      %v952 = vmul.f32 %v951, 0.6931472
      %v953 = vlog2.pop %v789
      %v954 = vmul.f32 %v953, 0.6931472
      %v955 = vlog2.pop %v790
      %v956 = vmul.f32 %v955, 0.6931472
      %v957 = vlog2.pop %v791
      %v958 = vmul.f32 %v957, 0.6931472
      %v959 = vlog2.pop %v792
      %v960 = vmul.f32 %v959, 0.6931472
      %v961 = vlog2.pop %v793
      %v962 = vmul.f32 %v961, 0.6931472
      %v963 = vlog2.pop %v794
      %v964 = vmul.f32 %v963, 0.6931472
      %v965 = vlog2.pop %v795
      %v966 = vmul.f32 %v965, 0.6931472
      %v967 = vlog2.pop %v796
      %v968 = vmul.f32 %v967, 0.6931472
      %v969 = vlog2.pop %v797
      %v970 = vmul.f32 %v969, 0.6931472
      %v971 = vlog2.pop %v798
      %v972 = vmul.f32 %v971, 0.6931472
      %v973 = vadd.f32 %v527, %v942
      %v974 = vadd.f32 %v528, %v944
      %v975 = vadd.f32 %v529, %v946
      %v976 = vadd.f32 %v530, %v948
      %v977 = vadd.f32 %v531, %v950
      %v978 = vadd.f32 %v532, %v952
      %v979 = vadd.f32 %v533, %v954
      %v980 = vadd.f32 %v534, %v956
      %v981 = vadd.f32 %v535, %v958
      %v982 = vadd.f32 %v536, %v960
      %v983 = vadd.f32 %v537, %v962
      %v984 = vadd.f32 %v538, %v964
      %v985 = vadd.f32 %v539, %v966
      %v986 = vadd.f32 %v540, %v968
      %v987 = vadd.f32 %v541, %v970
      %v988 = vadd.f32 %v542, %v972
      %v989 = vsel %vm413, %v973, 0.0
      %v990 = vsel %vm414, %v974, 0.0
      %v991 = vsel %vm415, %v975, 0.0
      %v992 = vsel %vm416, %v976, 0.0
      %v993 = vsel %vm417, %v977, 0.0
      %v994 = vsel %vm418, %v978, 0.0
      %v995 = vsel %vm419, %v979, 0.0
      %v996 = vsel %vm420, %v980, 0.0
      %v997 = vsel %vm421, %v981, 0.0
      %v998 = vsel %vm422, %v982, 0.0
      %v999 = vsel %vm423, %v983, 0.0
      %v1000 = vsel %vm424, %v984, 0.0
      %v1001 = vsel %vm425, %v985, 0.0
      %v1002 = vsel %vm426, %v986, 0.0
      %v1003 = vsel %vm427, %v987, 0.0
      %v1004 = vsel %vm428, %v988, 0.0
      %v1005 = vld [vmem:[#allocation6] sm:$0x1]
      %v1006 = vsel %vm799, %v989, 0.0
      %v1007 = vsel %vm799, %v990, 0.0
      %v1008 = vadd.f32 %v1006, %v1007
      %v1009 = vsel %vm799, %v991, 0.0
      %v1010 = vadd.f32 %v1008, %v1009
      %v1011 = vsel %vm799, %v992, 0.0
      %v1012 = vadd.f32 %v1010, %v1011
      %v1013 = vsel %vm799, %v993, 0.0
      %v1014 = vadd.f32 %v1012, %v1013
      %v1015 = vsel %vm799, %v994, 0.0
      %v1016 = vadd.f32 %v1014, %v1015
      %v1017 = vsel %vm799, %v995, 0.0
      %v1018 = vadd.f32 %v1016, %v1017
      %v1019 = vsel %vm799, %v996, 0.0
      %v1020 = vadd.f32 %v1018, %v1019
      %v1021 = vsel %vm799, %v997, 0.0
      %v1022 = vadd.f32 %v1020, %v1021
      %v1023 = vsel %vm799, %v998, 0.0
      %v1024 = vadd.f32 %v1022, %v1023
      %v1025 = vsel %vm799, %v999, 0.0
      %v1026 = vadd.f32 %v1024, %v1025
      %v1027 = vsel %vm799, %v1000, 0.0
      %v1028 = vadd.f32 %v1026, %v1027
      %v1029 = vsel %vm799, %v1001, 0.0
      %v1030 = vadd.f32 %v1028, %v1029
      %v1031 = vsel %vm799, %v1002, 0.0
      %v1032 = vadd.f32 %v1030, %v1031
      %v1033 = vsel %vm799, %v1003, 0.0
      %v1034 = vadd.f32 %v1032, %v1033
      %v1035 = vsel %vm799, %v1004, 0.0
      %v1036 = vadd.f32 %v1034, %v1035
      %1037 = vadd.xlane.f32.xlu0 %v1036
      %v1038 = vpop.xlane.xlu0 %1037
      %v1039 = vrot.slane %v1038, 4
      %v1040 = vadd.f32 %v1038, %v1039
      %v1041 = vrot.slane %v1040, 2
      %v1042 = vadd.f32 %v1040, %v1041
      %v1043 = vrot.slane %v1042, 1
      %v1044 = vadd.f32 %v1042, %v1043
      %s1045 = vtos %v1044
      %v1046 = vstv %s1045
      %v1047 = vadd.f32 %v1005, %v1046
      %vm1048 = vcmask 0
      %1049 = vst.msk [vmem:[#allocation6] sm:$0x1] %vm1048, %v1047
    $region38: #{tpu_custom_call.1} parent=1 // pred_fallthru
      _
    // Predicated region
    $region39: #{tpu_custom_call.1} parent=1 // pred_check
      %p1050 = pneg %p28
    $region40: #{tpu_custom_call.1} parent=1 // pred_check_branch
      %1052 = sbr.rel (%p1050) target = $region42
    $region41: #{tpu_custom_call.1} parent=1 // pred_region
      %v1053 = vlog2.pop %v935
      %v1054 = vmul.f32 %v1053, 0.6931472
      %v1055 = vadd.f32 %v854, %v1054
      %v1056 = vsel %vm429, %v1055, 0.0
      %v1057 = vld [vmem:[#allocation7] sm:$0x1]
      %vm1058 = vcmask 1040384
      %v1059 = vsel %vm1058, %v1056, 0.0
      %1060 = vadd.xlane.f32.xlu0 %v1059
      %v1061 = vpop.xlane.xlu0 %1060
      %v1062 = vrot.slane %v1061, 4
      %v1063 = vadd.f32 %v1061, %v1062
      %v1064 = vrot.slane %v1063, 2
      %v1065 = vadd.f32 %v1063, %v1064
      %v1066 = vrot.slane %v1065, 1
      %v1067 = vadd.f32 %v1065, %v1066
      %s1068 = vtos %v1067
      %v1069 = vstv %s1068
      %v1070 = vadd.f32 %v1057, %v1069
      %vm1071 = vcmask 0
      %1072 = vst.msk [vmem:[#allocation7] sm:$0x1] %vm1071, %v1070
    $region42: #{tpu_custom_call.1} parent=1 // pred_fallthru
      _
    // Predicated region
    $region43: #{tpu_custom_call.1} parent=1 // pred_check
      _
    $region44: #{tpu_custom_call.1} parent=1 // pred_check_branch
      %1074 = sbr.rel (%p30) target = $region46
    $region45: #{tpu_custom_call.1} parent=1 // pred_region
      %v1075 = vld [vmem:[#allocation6] sm:$0x1]
      %v1076 = vld [vmem:[#allocation7] sm:$0x1]
      %v1077 = vadd.f32 %v1075, %v1076
      %v1078 = vld [vmem:[#allocation8] sm:$0x1]
      %v1079 = vmul.f32 %v1078, 2.0
      %v1080 = vsub.f32 %v1077, %v1079
      %v1081 = vmul.f32 %v1080, 0.0625
      %s1082 = vtos %v1081
      %s1083 = scalar_lea.smem [#allocation14], 0
      %1084 = sst [smem:[%s1083]] %s1082
    $region46: #{tpu_custom_call.1} parent=1 // pred_fallthru
      _
    // Predicated region
    $region47: #{tpu_custom_call.1} parent=1 // pred_check
      _
    $region48: #{tpu_custom_call.1} parent=1 // pred_check_branch
      %1086 = sbr.rel (0) target = $region50
    $region49: #{tpu_custom_call.1} parent=1 // pred_region
      %s1088 = ssub.s32 16, 16
      %1089 = vsyncadd [#allocation13], %s1088
      %1092 = dma.smem_to_hbm [#allocation14], 16, %s3, [#allocation13]
    $region50: #{tpu_custom_call.1} parent=1 // pred_fallthru
      _
    // Predicated region
    $region51: #{tpu_custom_call.1} parent=1 // pred_check
      _
    $region52: #{tpu_custom_call.1} parent=1 // pred_check_branch
      %1094 = sbr.rel (0) target = $region54
    $region53: #{tpu_custom_call.1} parent=1 // pred_region
      %1095 = dma.done [#allocation13], 16
    $region54: #{tpu_custom_call.1} parent=1 // pred_fallthru
      _
    %1096 = sfence
    %1097 = vsyncpa [#allocation12], 1
    %1098 = vsyncpa [#allocation13], 1

</llo_original>
